<compile_context>
chip_gen: v5e
topology: v5e:2x2
jax: 0.10.0
libtpu: 0.0.40
codegen_flags: <defaults>
</compile_context>

<pallas_src>
import jax
import jax.numpy as jnp
from jax import lax
from jax.experimental import pallas as pl
from jax.experimental.pallas import tpu as pltpu

# Synthetic (small) dims consistent with the module (real: W=300, P=15, H=512, ND=512)
WORD_SIZE = 32
POS_SIZE = 16
HIDDEN = 32
ND = 64
UNIT_LENGTH = 4
MAX_LEN = 200
NUM_CLASSES = MAX_LEN // UNIT_LENGTH  # 50
NC_PAD = 128                          # lane-dense padded output width


# ----------------------------- fused Pallas kernel ----------------------------

def fused_kernel(maxlen_ref, cap_ref,                      # SMEM (1,), VMEM (B_pad,1) int32
                 word_ref, pos_ref,                        # time-major flat (T*B_pad, W/P) bf16
                 wpos_ref, bpos_ref, win_ref, bin_ref,     # embedding linears
                 wih_ref, whh_ref, gib_ref, bhn_ref, h0_ref,   # BiGRU (per-gate stacked)
                 w1_ref, aux1_ref, w2_ref, aux2_ref,
                 w3_ref, aux3_ref, w4_ref, b4_ref,         # output MLP
                 out_ref,                                  # (B_pad, NC_PAD) f32
                 gi_fr, gi_fz, gi_fn, gi_br, gi_bz, gi_bn):  # VMEM scratch (T*B_pad, H) f32
    B_pad = cap_ref.shape[0]
    H = h0_ref.shape[2]

    # ---- 1) text embedding: inputs = word + pos @ Wpos^T + bpos ; emb = inputs @ Win^T + bin
    pos_emb = jnp.dot(pos_ref[...], wpos_ref[...],
                      preferred_element_type=jnp.float32) + bpos_ref[...]
    inp = word_ref[...].astype(jnp.float32) + pos_emb
    emb = jnp.dot(inp.astype(jnp.bfloat16), win_ref[...],
                  preferred_element_type=jnp.float32) + bin_ref[...]
    emb16 = emb.astype(jnp.bfloat16)                       # (T*B_pad, H)

    # ---- 2) hoisted input-side GRU gate projections for ALL timesteps (off the serial path)
    #         gate order: [f_r, f_z, f_n, b_r, b_z, b_n]; r/z biases already include bhh
    gi_fr[...] = jnp.dot(emb16, wih_ref[0], preferred_element_type=jnp.float32) + gib_ref[0]
    gi_fz[...] = jnp.dot(emb16, wih_ref[1], preferred_element_type=jnp.float32) + gib_ref[1]
    gi_fn[...] = jnp.dot(emb16, wih_ref[2], preferred_element_type=jnp.float32) + gib_ref[2]
    gi_br[...] = jnp.dot(emb16, wih_ref[3], preferred_element_type=jnp.float32) + gib_ref[3]
    gi_bz[...] = jnp.dot(emb16, wih_ref[4], preferred_element_type=jnp.float32) + gib_ref[4]
    gi_bn[...] = jnp.dot(emb16, wih_ref[5], preferred_element_type=jnp.float32) + gib_ref[5]

    # ---- 3) length-masked BiGRU recurrence, trip count bounded by max(cap_lens)
    whh_fr = whh_ref[0]; whh_fz = whh_ref[1]; whh_fn = whh_ref[2]
    whh_br = whh_ref[3]; whh_bz = whh_ref[4]; whh_bn = whh_ref[5]
    bhn_f = bhn_ref[0]                                     # (1, H) f32
    bhn_b = bhn_ref[1]
    cap = cap_ref[...]                                     # (B_pad, 1) int32
    max_len = maxlen_ref[0]                                # scalar int32 (SMEM)

    h0f = jnp.broadcast_to(h0_ref[0], (B_pad, H))
    h0b = jnp.broadcast_to(h0_ref[1], (B_pad, H))

    def gru_step(h, gr, gz, gn, w_r, w_z, w_n, bn):
        h16 = h.astype(jnp.bfloat16)
        r = jax.nn.sigmoid(gr + jnp.dot(h16, w_r, preferred_element_type=jnp.float32))
        z = jax.nn.sigmoid(gz + jnp.dot(h16, w_z, preferred_element_type=jnp.float32))
        n = jnp.tanh(gn + r * (jnp.dot(h16, w_n, preferred_element_type=jnp.float32) + bn))
        return (1.0 - z) * n + z * h

    def body(t, carry):
        hf, hb = carry
        # forward direction: timestep t (hidden only updates while t < cap_len)
        row_f = pl.multiple_of(t * B_pad, B_pad)
        hf_new = gru_step(hf,
                          gi_fr[pl.ds(row_f, B_pad), :],
                          gi_fz[pl.ds(row_f, B_pad), :],
                          gi_fn[pl.ds(row_f, B_pad), :],
                          whh_fr, whh_fz, whh_fn, bhn_f)
        hf = jnp.where(t < cap, hf_new, hf)
        # backward direction: timestep tb = max_len-1-t (first real update at cap_len-1)
        tb = max_len - 1 - t
        row_b = pl.multiple_of(tb * B_pad, B_pad)
        hb_new = gru_step(hb,
                          gi_br[pl.ds(row_b, B_pad), :],
                          gi_bz[pl.ds(row_b, B_pad), :],
                          gi_bn[pl.ds(row_b, B_pad), :],
                          whh_br, whh_bz, whh_bn, bhn_b)
        hb = jnp.where(tb < cap, hb_new, hb)
        return hf, hb

    hf, hb = lax.fori_loop(0, max_len, body, (h0f, h0b))

    # ---- 4) output MLP: 3x [Linear -> LayerNorm -> LeakyReLU(0.2)] + Linear
    def layer_norm(x, gamma, beta):
        mu = jnp.mean(x, axis=-1, keepdims=True)
        var = jnp.mean((x - mu) ** 2, axis=-1, keepdims=True)
        return (x - mu) * lax.rsqrt(var + 1e-5) * gamma + beta

    def leaky_relu(x):
        return jnp.where(x >= 0.0, x, 0.2 * x)

    # cat([hf, hb]) @ W1  ==  hf @ W1[:H] + hb @ W1[H:]   (avoids a lane-concat at small H)
    h = (jnp.dot(hf.astype(jnp.bfloat16), w1_ref[0:H, :], preferred_element_type=jnp.float32)
         + jnp.dot(hb.astype(jnp.bfloat16), w1_ref[H:2 * H, :], preferred_element_type=jnp.float32)
         + aux1_ref[0:1, :])
    h = leaky_relu(layer_norm(h, aux1_ref[1:2, :], aux1_ref[2:3, :]))
    h = jnp.dot(h.astype(jnp.bfloat16), w2_ref[...],
                preferred_element_type=jnp.float32) + aux2_ref[0:1, :]
    h = leaky_relu(layer_norm(h, aux2_ref[1:2, :], aux2_ref[2:3, :]))
    h = jnp.dot(h.astype(jnp.bfloat16), w3_ref[...],
                preferred_element_type=jnp.float32) + aux3_ref[0:1, :]
    h = leaky_relu(layer_norm(h, aux3_ref[1:2, :], aux3_ref[2:3, :]))
    # lane-dense (B_pad, 128) store; padded columns carry zero weights/bias, sliced away outside
    out_ref[...] = jnp.dot(h.astype(jnp.bfloat16), w4_ref[...],
                           preferred_element_type=jnp.float32) + b4_ref[...]


# ------------------------------ parameters -----------------------------------

def init_params(key):
    ks = jax.random.split(key, 24)

    def w(k, shape, scale=0.05):
        return scale * jax.random.normal(k, shape, dtype=jnp.float32)

    H = HIDDEN
    p = {}
    # pos_emb / input_emb linears (pre-transposed to (in, out)); MXU weights in bf16
    p['wpos_T'] = w(ks[0], (POS_SIZE, WORD_SIZE)).astype(jnp.bfloat16)
    p['bpos'] = w(ks[1], (1, WORD_SIZE))
    p['win_T'] = w(ks[2], (WORD_SIZE, H)).astype(jnp.bfloat16)
    p['bin'] = w(ks[3], (1, H))

    # Bidirectional GRU, per-gate weights stacked as [f_r, f_z, f_n, b_r, b_z, b_n]
    wih = w(ks[4], (6, H, H))
    whh = w(ks[5], (6, H, H))
    bih = w(ks[6], (6, 1, H))
    bhh = w(ks[7], (6, 1, H))
    p['wih'] = wih.astype(jnp.bfloat16)
    p['whh'] = whh.astype(jnp.bfloat16)
    # fold biases: r/z gates get bih+bhh up front; n gate keeps only bih up front,
    # bhh_n must remain inside the r*(.) term (matches torch.nn.GRU exactly).
    gib = bih.at[0].add(bhh[0]).at[1].add(bhh[1]).at[3].add(bhh[3]).at[4].add(bhh[4])
    p['gib'] = gib                                   # (6, 1, H) f32
    p['bhh_n'] = jnp.stack([bhh[2, 0], bhh[5, 0]])[:, None, :]   # (2, 1, H) f32
    # learnable initial hidden (2, 1, H) — [forward, backward]
    p['h0'] = w(ks[8], (2, 1, H))

    # output MLP: [Linear, LayerNorm, LeakyReLU] x3 + Linear
    dims = [(2 * H, ND), (ND, ND // 2), (ND // 2, ND // 4)]
    for i, (din, dout) in enumerate(dims):
        p[f'w{i + 1}'] = w(ks[9 + i], (din, dout)).astype(jnp.bfloat16)
        b = w(ks[12 + i], (1, dout))
        g = jnp.ones((1, dout), jnp.float32)
        be = jnp.zeros((1, dout), jnp.float32)
        p[f'aux{i + 1}'] = jnp.concatenate([b, g, be], axis=0)   # (3, dout): [bias; gamma; beta]
    w4 = w(ks[15], (ND // 4, NUM_CLASSES))
    b4 = w(ks[16], (1, NUM_CLASSES))
    p['w4'] = jnp.pad(w4, ((0, 0), (0, NC_PAD - NUM_CLASSES))).astype(jnp.bfloat16)
    p['b4'] = jnp.pad(b4, ((0, 0), (0, NC_PAD - NUM_CLASSES)))
    return p


# ------------------------------ forward pass ----------------------------------

@jax.jit
def guo_len_est_forward(params, word_embs, pos_onehot, cap_lens, orig_length):
    B, T, W = word_embs.shape
    P = pos_onehot.shape[-1]
    H = HIDDEN
    B_pad = ((B + 7) // 8) * 8              # pad batch (sublane dim) to a multiple of 8
    pad_b = B_pad - B

    word_p = jnp.pad(word_embs.astype(jnp.float32), ((0, pad_b), (0, 0), (0, 0)))
    pos_p = jnp.pad(pos_onehot.astype(jnp.float32), ((0, pad_b), (0, 0), (0, 0)))
    cap_p = jnp.pad(cap_lens.astype(jnp.int32), (0, pad_b))   # padded rows: len 0 -> stay at h0

    # time-major flat layout (row = t*B_pad + b): the recurrence slices one aligned
    # sublane tile per step, and no transpose of any intermediate is needed.
    word_tm = word_p.transpose(1, 0, 2).reshape(T * B_pad, W).astype(jnp.bfloat16)
    pos_tm = pos_p.transpose(1, 0, 2).reshape(T * B_pad, P).astype(jnp.bfloat16)
    cap_col = cap_p.reshape(B_pad, 1)
    # loop trip bound (SMEM): max valid length, clamped to the padded sequence length
    max_len = jnp.minimum(jnp.max(cap_p), T).astype(jnp.int32).reshape(1)

    vmem = pl.BlockSpec(memory_space=pltpu.MemorySpace.VMEM)
    smem = pl.BlockSpec(memory_space=pltpu.MemorySpace.SMEM)

    out_padded = pl.pallas_call(
        fused_kernel,
        out_shape=jax.ShapeDtypeStruct((B_pad, NC_PAD), jnp.float32),
        in_specs=[smem] + [vmem] * 20,
        out_specs=vmem,
        scratch_shapes=[pltpu.VMEM((T * B_pad, H), jnp.float32) for _ in range(6)],
    )(max_len, cap_col, word_tm, pos_tm,
      params['wpos_T'], params['bpos'], params['win_T'], params['bin'],
      params['wih'], params['whh'], params['gib'], params['bhh_n'], params['h0'],
      params['w1'], params['aux1'], params['w2'], params['aux2'],
      params['w3'], params['aux3'], params['w4'], params['b4'])

    pred_dis = out_padded[:B, :NUM_CLASSES]

    # gt label construction: trivial integer glue (kept in plain JAX)
    gt_dis = jnp.minimum(orig_length // UNIT_LENGTH,
                         MAX_LEN // UNIT_LENGTH - 1).astype(jnp.int32)
    return {'pred_dis': pred_dis, 'gt_dis': gt_dis}


# --------------------------------- main ---------------------------------------

if __name__ == "__main__":
    key = jax.random.PRNGKey(0)
    kp, kw, kpo = jax.random.split(key, 3)
    params = init_params(kp)

    B, T = 2, 8
    word_embs = jax.random.normal(kw, (B, T, WORD_SIZE), dtype=jnp.float32)
    pos_ids = jax.random.randint(kpo, (B, T), 0, POS_SIZE)
    pos_onehot = jax.nn.one_hot(pos_ids, POS_SIZE, dtype=jnp.float32)
    cap_lens = jnp.array([8, 5], dtype=jnp.int32)        # valid caption lengths
    orig_length = jnp.array([132, 47], dtype=jnp.int32)  # motion lengths in frames

    out = guo_len_est_forward(params, word_embs, pos_onehot, cap_lens, orig_length)
    jax.block_until_ready(out)

    assert out['pred_dis'].shape == (B, NUM_CLASSES)
    assert out['pred_dis'].dtype == jnp.float32
    assert out['gt_dis'].shape == (B,)
    # TODO(synk): checkpoint loading / hydra instantiate() of the textencoder is host-side
    # config machinery with no Pallas equivalent; weights are synthetic-initialized here.
    print("KERNEL_OK")
</pallas_src>

<mosaic_0001>
module attributes {stable_mosaic.version = 11 : i64} {
  func.func @fused_kernel(%arg0: memref<1xi32, #tpu.memory_space<smem>>, %arg1: memref<8x1xi32, #tpu.memory_space<vmem>>, %arg2: memref<64x32xbf16, #tpu.memory_space<vmem>>, %arg3: memref<64x16xbf16, #tpu.memory_space<vmem>>, %arg4: memref<16x32xbf16, #tpu.memory_space<vmem>>, %arg5: memref<1x32xf32, #tpu.memory_space<vmem>>, %arg6: memref<32x32xbf16, #tpu.memory_space<vmem>>, %arg7: memref<1x32xf32, #tpu.memory_space<vmem>>, %arg8: memref<6x32x32xbf16, #tpu.memory_space<vmem>>, %arg9: memref<6x32x32xbf16, #tpu.memory_space<vmem>>, %arg10: memref<6x1x32xf32, #tpu.memory_space<vmem>>, %arg11: memref<2x1x32xf32, #tpu.memory_space<vmem>>, %arg12: memref<2x1x32xf32, #tpu.memory_space<vmem>>, %arg13: memref<64x64xbf16, #tpu.memory_space<vmem>>, %arg14: memref<3x64xf32, #tpu.memory_space<vmem>>, %arg15: memref<64x32xbf16, #tpu.memory_space<vmem>>, %arg16: memref<3x32xf32, #tpu.memory_space<vmem>>, %arg17: memref<32x16xbf16, #tpu.memory_space<vmem>>, %arg18: memref<3x16xf32, #tpu.memory_space<vmem>>, %arg19: memref<16x128xbf16, #tpu.memory_space<vmem>>, %arg20: memref<1x128xf32, #tpu.memory_space<vmem>>, %arg21: memref<8x128xf32, #tpu.memory_space<vmem>>, %arg22: memref<64x32xf32, #tpu.memory_space<vmem>>, %arg23: memref<64x32xf32, #tpu.memory_space<vmem>>, %arg24: memref<64x32xf32, #tpu.memory_space<vmem>>, %arg25: memref<64x32xf32, #tpu.memory_space<vmem>>, %arg26: memref<64x32xf32, #tpu.memory_space<vmem>>, %arg27: memref<64x32xf32, #tpu.memory_space<vmem>>) attributes {dimension_semantics = [], scalar_prefetch = 0 : i64, scratch_operands = 6 : i64, tpu.core_type = #tpu.core_type<tc>} {
    %c0 = arith.constant 0 : index
    %c0_0 = arith.constant 0 : index
    %0 = vector.load %arg3[%c0, %c0_0] : memref<64x16xbf16, #tpu.memory_space<vmem>>, vector<64x16xbf16>
    %c0_1 = arith.constant 0 : index
    %c0_2 = arith.constant 0 : index
    %1 = vector.load %arg4[%c0_1, %c0_2] : memref<16x32xbf16, #tpu.memory_space<vmem>>, vector<16x32xbf16>
    %cst = arith.constant dense<0.000000e+00> : vector<64x32xf32>
    %2 = tpu.matmul %0, %1, %cst {dimension_numbers = #tpu.dot_dimension_numbers<[1], [0], [0], [1], [0, 0, 1, 1], [], []>} : vector<64x16xbf16>, vector<16x32xbf16>, vector<64x32xf32> -> vector<64x32xf32>
    %c0_3 = arith.constant 0 : index
    %c0_4 = arith.constant 0 : index
    %3 = vector.load %arg5[%c0_3, %c0_4] : memref<1x32xf32, #tpu.memory_space<vmem>>, vector<1x32xf32>
    %4 = vector.broadcast %3 : vector<1x32xf32> to vector<64x32xf32>
    %5 = arith.addf %2, %4 : vector<64x32xf32>
    %c0_5 = arith.constant 0 : index
    %c0_6 = arith.constant 0 : index
    %6 = vector.load %arg2[%c0_5, %c0_6] : memref<64x32xbf16, #tpu.memory_space<vmem>>, vector<64x32xbf16>
    %7 = arith.extf %6 : vector<64x32xbf16> to vector<64x32xf32>
    %8 = arith.addf %7, %5 : vector<64x32xf32>
    %9 = arith.truncf %8 : vector<64x32xf32> to vector<64x32xbf16>
    %c0_7 = arith.constant 0 : index
    %c0_8 = arith.constant 0 : index
    %10 = vector.load %arg6[%c0_7, %c0_8] : memref<32x32xbf16, #tpu.memory_space<vmem>>, vector<32x32xbf16>
    %cst_9 = arith.constant dense<0.000000e+00> : vector<64x32xf32>
    %11 = tpu.matmul %9, %10, %cst_9 {dimension_numbers = #tpu.dot_dimension_numbers<[1], [0], [0], [1], [0, 0, 1, 1], [], []>} : vector<64x32xbf16>, vector<32x32xbf16>, vector<64x32xf32> -> vector<64x32xf32>
    %c0_10 = arith.constant 0 : index
    %c0_11 = arith.constant 0 : index
    %12 = vector.load %arg7[%c0_10, %c0_11] : memref<1x32xf32, #tpu.memory_space<vmem>>, vector<1x32xf32>
    %13 = vector.broadcast %12 : vector<1x32xf32> to vector<64x32xf32>
    %14 = arith.addf %11, %13 : vector<64x32xf32>
    %15 = arith.truncf %14 : vector<64x32xf32> to vector<64x32xbf16>
    %c0_12 = arith.constant 0 : index
    %c0_13 = arith.constant 0 : index
    %c0_14 = arith.constant 0 : index
    %16 = vector.load %arg8[%c0_12, %c0_13, %c0_14] : memref<6x32x32xbf16, #tpu.memory_space<vmem>>, vector<1x32x32xbf16>
    %17 = vector.shape_cast %16 : vector<1x32x32xbf16> to vector<32x32xbf16>
    %cst_15 = arith.constant dense<0.000000e+00> : vector<64x32xf32>
    %18 = tpu.matmul %15, %17, %cst_15 {dimension_numbers = #tpu.dot_dimension_numbers<[1], [0], [0], [1], [0, 0, 1, 1], [], []>} : vector<64x32xbf16>, vector<32x32xbf16>, vector<64x32xf32> -> vector<64x32xf32>
    %c0_16 = arith.constant 0 : index
    %c0_17 = arith.constant 0 : index
    %c0_18 = arith.constant 0 : index
    %19 = vector.load %arg10[%c0_16, %c0_17, %c0_18] : memref<6x1x32xf32, #tpu.memory_space<vmem>>, vector<1x1x32xf32>
    %20 = vector.shape_cast %19 : vector<1x1x32xf32> to vector<1x32xf32>
    %21 = vector.broadcast %20 : vector<1x32xf32> to vector<64x32xf32>
    %22 = arith.addf %18, %21 : vector<64x32xf32>
    %c0_19 = arith.constant 0 : index
    %c0_20 = arith.constant 0 : index
    %23 = vector.load %arg22[%c0_19, %c0_20] : memref<64x32xf32, #tpu.memory_space<vmem>>, vector<64x32xf32>
    tpu.vector_store %arg22[%c0_19, %c0_20], %22 {strides = array<i32>} : memref<64x32xf32, #tpu.memory_space<vmem>>, vector<64x32xf32>,
    %c1 = arith.constant 1 : index
    %c0_21 = arith.constant 0 : index
    %c0_22 = arith.constant 0 : index
    %24 = vector.load %arg8[%c1, %c0_21, %c0_22] : memref<6x32x32xbf16, #tpu.memory_space<vmem>>, vector<1x32x32xbf16>
    %25 = vector.shape_cast %24 : vector<1x32x32xbf16> to vector<32x32xbf16>
    %cst_23 = arith.constant dense<0.000000e+00> : vector<64x32xf32>
    %26 = tpu.matmul %15, %25, %cst_23 {dimension_numbers = #tpu.dot_dimension_numbers<[1], [0], [0], [1], [0, 0, 1, 1], [], []>} : vector<64x32xbf16>, vector<32x32xbf16>, vector<64x32xf32> -> vector<64x32xf32>
    %c1_24 = arith.constant 1 : index
    %c0_25 = arith.constant 0 : index
    %c0_26 = arith.constant 0 : index
    %27 = vector.load %arg10[%c1_24, %c0_25, %c0_26] : memref<6x1x32xf32, #tpu.memory_space<vmem>>, vector<1x1x32xf32>
    %28 = vector.shape_cast %27 : vector<1x1x32xf32> to vector<1x32xf32>
    %29 = vector.broadcast %28 : vector<1x32xf32> to vector<64x32xf32>
    %30 = arith.addf %26, %29 : vector<64x32xf32>
    %c0_27 = arith.constant 0 : index
    %c0_28 = arith.constant 0 : index
    %31 = vector.load %arg23[%c0_27, %c0_28] : memref<64x32xf32, #tpu.memory_space<vmem>>, vector<64x32xf32>
    tpu.vector_store %arg23[%c0_27, %c0_28], %30 {strides = array<i32>} : memref<64x32xf32, #tpu.memory_space<vmem>>, vector<64x32xf32>,
    %c2 = arith.constant 2 : index
    %c0_29 = arith.constant 0 : index
    %c0_30 = arith.constant 0 : index
    %32 = vector.load %arg8[%c2, %c0_29, %c0_30] : memref<6x32x32xbf16, #tpu.memory_space<vmem>>, vector<1x32x32xbf16>
    %33 = vector.shape_cast %32 : vector<1x32x32xbf16> to vector<32x32xbf16>
    %cst_31 = arith.constant dense<0.000000e+00> : vector<64x32xf32>
    %34 = tpu.matmul %15, %33, %cst_31 {dimension_numbers = #tpu.dot_dimension_numbers<[1], [0], [0], [1], [0, 0, 1, 1], [], []>} : vector<64x32xbf16>, vector<32x32xbf16>, vector<64x32xf32> -> vector<64x32xf32>
    %c2_32 = arith.constant 2 : index
    %c0_33 = arith.constant 0 : index
    %c0_34 = arith.constant 0 : index
    %35 = vector.load %arg10[%c2_32, %c0_33, %c0_34] : memref<6x1x32xf32, #tpu.memory_space<vmem>>, vector<1x1x32xf32>
    %36 = vector.shape_cast %35 : vector<1x1x32xf32> to vector<1x32xf32>
    %37 = vector.broadcast %36 : vector<1x32xf32> to vector<64x32xf32>
    %38 = arith.addf %34, %37 : vector<64x32xf32>
    %c0_35 = arith.constant 0 : index
    %c0_36 = arith.constant 0 : index
    %39 = vector.load %arg24[%c0_35, %c0_36] : memref<64x32xf32, #tpu.memory_space<vmem>>, vector<64x32xf32>
    tpu.vector_store %arg24[%c0_35, %c0_36], %38 {strides = array<i32>} : memref<64x32xf32, #tpu.memory_space<vmem>>, vector<64x32xf32>,
    %c3 = arith.constant 3 : index
    %c0_37 = arith.constant 0 : index
    %c0_38 = arith.constant 0 : index
    %40 = vector.load %arg8[%c3, %c0_37, %c0_38] : memref<6x32x32xbf16, #tpu.memory_space<vmem>>, vector<1x32x32xbf16>
    %41 = vector.shape_cast %40 : vector<1x32x32xbf16> to vector<32x32xbf16>
    %cst_39 = arith.constant dense<0.000000e+00> : vector<64x32xf32>
    %42 = tpu.matmul %15, %41, %cst_39 {dimension_numbers = #tpu.dot_dimension_numbers<[1], [0], [0], [1], [0, 0, 1, 1], [], []>} : vector<64x32xbf16>, vector<32x32xbf16>, vector<64x32xf32> -> vector<64x32xf32>
    %c3_40 = arith.constant 3 : index
    %c0_41 = arith.constant 0 : index
    %c0_42 = arith.constant 0 : index
    %43 = vector.load %arg10[%c3_40, %c0_41, %c0_42] : memref<6x1x32xf32, #tpu.memory_space<vmem>>, vector<1x1x32xf32>
    %44 = vector.shape_cast %43 : vector<1x1x32xf32> to vector<1x32xf32>
    %45 = vector.broadcast %44 : vector<1x32xf32> to vector<64x32xf32>
    %46 = arith.addf %42, %45 : vector<64x32xf32>
    %c0_43 = arith.constant 0 : index
    %c0_44 = arith.constant 0 : index
    %47 = vector.load %arg25[%c0_43, %c0_44] : memref<64x32xf32, #tpu.memory_space<vmem>>, vector<64x32xf32>
    tpu.vector_store %arg25[%c0_43, %c0_44], %46 {strides = array<i32>} : memref<64x32xf32, #tpu.memory_space<vmem>>, vector<64x32xf32>,
    %c4 = arith.constant 4 : index
    %c0_45 = arith.constant 0 : index
    %c0_46 = arith.constant 0 : index
    %48 = vector.load %arg8[%c4, %c0_45, %c0_46] : memref<6x32x32xbf16, #tpu.memory_space<vmem>>, vector<1x32x32xbf16>
    %49 = vector.shape_cast %48 : vector<1x32x32xbf16> to vector<32x32xbf16>
    %cst_47 = arith.constant dense<0.000000e+00> : vector<64x32xf32>
    %50 = tpu.matmul %15, %49, %cst_47 {dimension_numbers = #tpu.dot_dimension_numbers<[1], [0], [0], [1], [0, 0, 1, 1], [], []>} : vector<64x32xbf16>, vector<32x32xbf16>, vector<64x32xf32> -> vector<64x32xf32>
    %c4_48 = arith.constant 4 : index
    %c0_49 = arith.constant 0 : index
    %c0_50 = arith.constant 0 : index
    %51 = vector.load %arg10[%c4_48, %c0_49, %c0_50] : memref<6x1x32xf32, #tpu.memory_space<vmem>>, vector<1x1x32xf32>
    %52 = vector.shape_cast %51 : vector<1x1x32xf32> to vector<1x32xf32>
    %53 = vector.broadcast %52 : vector<1x32xf32> to vector<64x32xf32>
    %54 = arith.addf %50, %53 : vector<64x32xf32>
    %c0_51 = arith.constant 0 : index
    %c0_52 = arith.constant 0 : index
    %55 = vector.load %arg26[%c0_51, %c0_52] : memref<64x32xf32, #tpu.memory_space<vmem>>, vector<64x32xf32>
    tpu.vector_store %arg26[%c0_51, %c0_52], %54 {strides = array<i32>} : memref<64x32xf32, #tpu.memory_space<vmem>>, vector<64x32xf32>,
    %c5 = arith.constant 5 : index
    %c0_53 = arith.constant 0 : index
    %c0_54 = arith.constant 0 : index
    %56 = vector.load %arg8[%c5, %c0_53, %c0_54] : memref<6x32x32xbf16, #tpu.memory_space<vmem>>, vector<1x32x32xbf16>
    %57 = vector.shape_cast %56 : vector<1x32x32xbf16> to vector<32x32xbf16>
    %cst_55 = arith.constant dense<0.000000e+00> : vector<64x32xf32>
    %58 = tpu.matmul %15, %57, %cst_55 {dimension_numbers = #tpu.dot_dimension_numbers<[1], [0], [0], [1], [0, 0, 1, 1], [], []>} : vector<64x32xbf16>, vector<32x32xbf16>, vector<64x32xf32> -> vector<64x32xf32>
    %c5_56 = arith.constant 5 : index
    %c0_57 = arith.constant 0 : index
    %c0_58 = arith.constant 0 : index
    %59 = vector.load %arg10[%c5_56, %c0_57, %c0_58] : memref<6x1x32xf32, #tpu.memory_space<vmem>>, vector<1x1x32xf32>
    %60 = vector.shape_cast %59 : vector<1x1x32xf32> to vector<1x32xf32>
    %61 = vector.broadcast %60 : vector<1x32xf32> to vector<64x32xf32>
    %62 = arith.addf %58, %61 : vector<64x32xf32>
    %c0_59 = arith.constant 0 : index
    %c0_60 = arith.constant 0 : index
    %63 = vector.load %arg27[%c0_59, %c0_60] : memref<64x32xf32, #tpu.memory_space<vmem>>, vector<64x32xf32>
    tpu.vector_store %arg27[%c0_59, %c0_60], %62 {strides = array<i32>} : memref<64x32xf32, #tpu.memory_space<vmem>>, vector<64x32xf32>,
    %c0_61 = arith.constant 0 : index
    %c0_62 = arith.constant 0 : index
    %c0_63 = arith.constant 0 : index
    %64 = vector.load %arg9[%c0_61, %c0_62, %c0_63] : memref<6x32x32xbf16, #tpu.memory_space<vmem>>, vector<1x32x32xbf16>
    %65 = vector.shape_cast %64 : vector<1x32x32xbf16> to vector<32x32xbf16>
    %c1_64 = arith.constant 1 : index
    %c0_65 = arith.constant 0 : index
    %c0_66 = arith.constant 0 : index
    %66 = vector.load %arg9[%c1_64, %c0_65, %c0_66] : memref<6x32x32xbf16, #tpu.memory_space<vmem>>, vector<1x32x32xbf16>
    %67 = vector.shape_cast %66 : vector<1x32x32xbf16> to vector<32x32xbf16>
    %c2_67 = arith.constant 2 : index
    %c0_68 = arith.constant 0 : index
    %c0_69 = arith.constant 0 : index
    %68 = vector.load %arg9[%c2_67, %c0_68, %c0_69] : memref<6x32x32xbf16, #tpu.memory_space<vmem>>, vector<1x32x32xbf16>
    %69 = vector.shape_cast %68 : vector<1x32x32xbf16> to vector<32x32xbf16>
    %c3_70 = arith.constant 3 : index
    %c0_71 = arith.constant 0 : index
    %c0_72 = arith.constant 0 : index
    %70 = vector.load %arg9[%c3_70, %c0_71, %c0_72] : memref<6x32x32xbf16, #tpu.memory_space<vmem>>, vector<1x32x32xbf16>
    %71 = vector.shape_cast %70 : vector<1x32x32xbf16> to vector<32x32xbf16>
    %c4_73 = arith.constant 4 : index
    %c0_74 = arith.constant 0 : index
    %c0_75 = arith.constant 0 : index
    %72 = vector.load %arg9[%c4_73, %c0_74, %c0_75] : memref<6x32x32xbf16, #tpu.memory_space<vmem>>, vector<1x32x32xbf16>
    %73 = vector.shape_cast %72 : vector<1x32x32xbf16> to vector<32x32xbf16>
    %c5_76 = arith.constant 5 : index
    %c0_77 = arith.constant 0 : index
    %c0_78 = arith.constant 0 : index
    %74 = vector.load %arg9[%c5_76, %c0_77, %c0_78] : memref<6x32x32xbf16, #tpu.memory_space<vmem>>, vector<1x32x32xbf16>
    %75 = vector.shape_cast %74 : vector<1x32x32xbf16> to vector<32x32xbf16>
    %c0_79 = arith.constant 0 : index
    %c0_80 = arith.constant 0 : index
    %c0_81 = arith.constant 0 : index
    %76 = vector.load %arg11[%c0_79, %c0_80, %c0_81] : memref<2x1x32xf32, #tpu.memory_space<vmem>>, vector<1x1x32xf32>
    %77 = vector.shape_cast %76 : vector<1x1x32xf32> to vector<1x32xf32>
    %c1_82 = arith.constant 1 : index
    %c0_83 = arith.constant 0 : index
    %c0_84 = arith.constant 0 : index
    %78 = vector.load %arg11[%c1_82, %c0_83, %c0_84] : memref<2x1x32xf32, #tpu.memory_space<vmem>>, vector<1x1x32xf32>
    %79 = vector.shape_cast %78 : vector<1x1x32xf32> to vector<1x32xf32>
    %c0_85 = arith.constant 0 : index
    %c0_86 = arith.constant 0 : index
    %80 = vector.load %arg1[%c0_85, %c0_86] : memref<8x1xi32, #tpu.memory_space<vmem>>, vector<8x1xi32>
    %c0_87 = arith.constant 0 : index
    %81 = memref.load %arg0[%c0_87] : memref<1xi32, #tpu.memory_space<smem>>
    %c0_88 = arith.constant 0 : index
    %c0_89 = arith.constant 0 : index
    %c0_90 = arith.constant 0 : index
    %82 = vector.load %arg12[%c0_88, %c0_89, %c0_90] : memref<2x1x32xf32, #tpu.memory_space<vmem>>, vector<1x1x32xf32>
    %83 = vector.shape_cast %82 : vector<1x1x32xf32> to vector<1x32xf32>
    %84 = vector.shape_cast %83 : vector<1x32xf32> to vector<1x32xf32>
    %85 = vector.broadcast %84 : vector<1x32xf32> to vector<8x32xf32>
    %c1_91 = arith.constant 1 : index
    %c0_92 = arith.constant 0 : index
    %c0_93 = arith.constant 0 : index
    %86 = vector.load %arg12[%c1_91, %c0_92, %c0_93] : memref<2x1x32xf32, #tpu.memory_space<vmem>>, vector<1x1x32xf32>
    %87 = vector.shape_cast %86 : vector<1x1x32xf32> to vector<1x32xf32>
    %88 = vector.shape_cast %87 : vector<1x32xf32> to vector<1x32xf32>
    %89 = vector.broadcast %88 : vector<1x32xf32> to vector<8x32xf32>
    %c0_i32 = arith.constant 0 : i32
    %90 = arith.subi %81, %c0_i32 : i32
    %91 = arith.addi %c0_i32, %90 : i32
    %c1_i32 = arith.constant 1 : i32
    %92:2 = scf.for %arg28 = %c0_i32 to %91 step %c1_i32 iter_args(%arg29 = %85, %arg30 = %89) -> (vector<8x32xf32>, vector<8x32xf32>)  : i32 {
      %c8_i32 = arith.constant 8 : i32
      %209 = arith.muli %arg28, %c8_i32 : i32
      %210 = tpu.assume_multiple %209, 8 : i32
      %211 = arith.index_cast %210 : i32 to index
      %c0_151 = arith.constant 0 : index
      %212 = vector.load %arg22[%211, %c0_151] : memref<64x32xf32, #tpu.memory_space<vmem>>, vector<8x32xf32>
      %213 = arith.index_cast %210 : i32 to index
      %c0_152 = arith.constant 0 : index
      %214 = vector.load %arg23[%213, %c0_152] : memref<64x32xf32, #tpu.memory_space<vmem>>, vector<8x32xf32>
      %215 = arith.index_cast %210 : i32 to index
      %c0_153 = arith.constant 0 : index
      %216 = vector.load %arg24[%215, %c0_153] : memref<64x32xf32, #tpu.memory_space<vmem>>, vector<8x32xf32>
      %217 = arith.truncf %arg29 : vector<8x32xf32> to vector<8x32xbf16>
      %cst_154 = arith.constant dense<0.000000e+00> : vector<8x32xf32>
      %218 = tpu.matmul %217, %65, %cst_154 {dimension_numbers = #tpu.dot_dimension_numbers<[1], [0], [0], [1], [0, 0, 1, 1], [], []>} : vector<8x32xbf16>, vector<32x32xbf16>, vector<8x32xf32> -> vector<8x32xf32>
      %219 = arith.addf %212, %218 : vector<8x32xf32>
      %220 = arith.negf %219 : vector<8x32xf32>
      %221 = math.exp %220 : vector<8x32xf32>
      %cst_155 = arith.constant 1.000000e+00 : f32
      %222 = vector.broadcast %cst_155 : f32 to vector<8x32xf32>
      %223 = arith.addf %222, %221 : vector<8x32xf32>
      %224 = arith.divf %222, %223 : vector<8x32xf32>
      %cst_156 = arith.constant dense<0.000000e+00> : vector<8x32xf32>
      %225 = tpu.matmul %217, %67, %cst_156 {dimension_numbers = #tpu.dot_dimension_numbers<[1], [0], [0], [1], [0, 0, 1, 1], [], []>} : vector<8x32xbf16>, vector<32x32xbf16>, vector<8x32xf32> -> vector<8x32xf32>
      %226 = arith.addf %214, %225 : vector<8x32xf32>
      %227 = arith.negf %226 : vector<8x32xf32>
      %228 = math.exp %227 : vector<8x32xf32>
      %cst_157 = arith.constant 1.000000e+00 : f32
      %229 = vector.broadcast %cst_157 : f32 to vector<8x32xf32>
      %230 = arith.addf %229, %228 : vector<8x32xf32>
      %231 = arith.divf %229, %230 : vector<8x32xf32>
      %cst_158 = arith.constant dense<0.000000e+00> : vector<8x32xf32>
      %232 = tpu.matmul %217, %69, %cst_158 {dimension_numbers = #tpu.dot_dimension_numbers<[1], [0], [0], [1], [0, 0, 1, 1], [], []>} : vector<8x32xbf16>, vector<32x32xbf16>, vector<8x32xf32> -> vector<8x32xf32>
      %233 = vector.broadcast %77 : vector<1x32xf32> to vector<8x32xf32>
      %234 = arith.addf %232, %233 : vector<8x32xf32>
      %235 = arith.mulf %224, %234 : vector<8x32xf32>
      %236 = arith.addf %216, %235 : vector<8x32xf32>
      %237 = math.tanh %236 : vector<8x32xf32>
      %cst_159 = arith.constant 1.000000e+00 : f32
      %238 = vector.broadcast %cst_159 : f32 to vector<8x32xf32>
      %239 = arith.subf %238, %231 : vector<8x32xf32>
      %240 = arith.mulf %239, %237 : vector<8x32xf32>
      %241 = arith.mulf %231, %arg29 : vector<8x32xf32>
      %242 = arith.addf %240, %241 : vector<8x32xf32>
      %243 = vector.broadcast %arg28 : i32 to vector<8x1xi32>
      %244 = arith.cmpi slt, %243, %80 : vector<8x1xi32>
      %245 = vector.shape_cast %244 : vector<8x1xi1> to vector<8x1xi1>
      %246 = vector.broadcast %245 : vector<8x1xi1> to vector<8x32xi1>
      %247 = arith.select %246, %242, %arg29 : vector<8x32xi1>, vector<8x32xf32>
      %c1_i32_160 = arith.constant 1 : i32
      %248 = arith.subi %81, %c1_i32_160 : i32
      %249 = arith.subi %248, %arg28 : i32
      %c8_i32_161 = arith.constant 8 : i32
      %250 = arith.muli %249, %c8_i32_161 : i32
      %251 = tpu.assume_multiple %250, 8 : i32
      %252 = arith.index_cast %251 : i32 to index
      %c0_162 = arith.constant 0 : index
      %253 = vector.load %arg25[%252, %c0_162] : memref<64x32xf32, #tpu.memory_space<vmem>>, vector<8x32xf32>
      %254 = arith.index_cast %251 : i32 to index
      %c0_163 = arith.constant 0 : index
      %255 = vector.load %arg26[%254, %c0_163] : memref<64x32xf32, #tpu.memory_space<vmem>>, vector<8x32xf32>
      %256 = arith.index_cast %251 : i32 to index
      %c0_164 = arith.constant 0 : index
      %257 = vector.load %arg27[%256, %c0_164] : memref<64x32xf32, #tpu.memory_space<vmem>>, vector<8x32xf32>
      %258 = arith.truncf %arg30 : vector<8x32xf32> to vector<8x32xbf16>
      %cst_165 = arith.constant dense<0.000000e+00> : vector<8x32xf32>
      %259 = tpu.matmul %258, %71, %cst_165 {dimension_numbers = #tpu.dot_dimension_numbers<[1], [0], [0], [1], [0, 0, 1, 1], [], []>} : vector<8x32xbf16>, vector<32x32xbf16>, vector<8x32xf32> -> vector<8x32xf32>
      %260 = arith.addf %253, %259 : vector<8x32xf32>
      %261 = arith.negf %260 : vector<8x32xf32>
      %262 = math.exp %261 : vector<8x32xf32>
      %cst_166 = arith.constant 1.000000e+00 : f32
      %263 = vector.broadcast %cst_166 : f32 to vector<8x32xf32>
      %264 = arith.addf %263, %262 : vector<8x32xf32>
      %265 = arith.divf %263, %264 : vector<8x32xf32>
      %cst_167 = arith.constant dense<0.000000e+00> : vector<8x32xf32>
      %266 = tpu.matmul %258, %73, %cst_167 {dimension_numbers = #tpu.dot_dimension_numbers<[1], [0], [0], [1], [0, 0, 1, 1], [], []>} : vector<8x32xbf16>, vector<32x32xbf16>, vector<8x32xf32> -> vector<8x32xf32>
      %267 = arith.addf %255, %266 : vector<8x32xf32>
      %268 = arith.negf %267 : vector<8x32xf32>
      %269 = math.exp %268 : vector<8x32xf32>
      %cst_168 = arith.constant 1.000000e+00 : f32
      %270 = vector.broadcast %cst_168 : f32 to vector<8x32xf32>
      %271 = arith.addf %270, %269 : vector<8x32xf32>
      %272 = arith.divf %270, %271 : vector<8x32xf32>
      %cst_169 = arith.constant dense<0.000000e+00> : vector<8x32xf32>
      %273 = tpu.matmul %258, %75, %cst_169 {dimension_numbers = #tpu.dot_dimension_numbers<[1], [0], [0], [1], [0, 0, 1, 1], [], []>} : vector<8x32xbf16>, vector<32x32xbf16>, vector<8x32xf32> -> vector<8x32xf32>
      %274 = vector.broadcast %79 : vector<1x32xf32> to vector<8x32xf32>
      %275 = arith.addf %273, %274 : vector<8x32xf32>
      %276 = arith.mulf %265, %275 : vector<8x32xf32>
      %277 = arith.addf %257, %276 : vector<8x32xf32>
      %278 = math.tanh %277 : vector<8x32xf32>
      %cst_170 = arith.constant 1.000000e+00 : f32
      %279 = vector.broadcast %cst_170 : f32 to vector<8x32xf32>
      %280 = arith.subf %279, %272 : vector<8x32xf32>
      %281 = arith.mulf %280, %278 : vector<8x32xf32>
      %282 = arith.mulf %272, %arg30 : vector<8x32xf32>
      %283 = arith.addf %281, %282 : vector<8x32xf32>
      %284 = vector.broadcast %249 : i32 to vector<8x1xi32>
      %285 = arith.cmpi slt, %284, %80 : vector<8x1xi32>
      %286 = vector.shape_cast %285 : vector<8x1xi1> to vector<8x1xi1>
      %287 = vector.broadcast %286 : vector<8x1xi1> to vector<8x32xi1>
      %288 = arith.select %287, %283, %arg30 : vector<8x32xi1>, vector<8x32xf32>
      scf.yield %247, %288 : vector<8x32xf32>, vector<8x32xf32>
    }
    %93 = arith.truncf %92#0 : vector<8x32xf32> to vector<8x32xbf16>
    %c0_94 = arith.constant 0 : index
    %c0_95 = arith.constant 0 : index
    %94 = vector.load %arg13[%c0_94, %c0_95] : memref<64x64xbf16, #tpu.memory_space<vmem>>, vector<32x64xbf16>
    %cst_96 = arith.constant dense<0.000000e+00> : vector<8x64xf32>
    %95 = tpu.matmul %93, %94, %cst_96 {dimension_numbers = #tpu.dot_dimension_numbers<[1], [0], [0], [1], [0, 0, 1, 1], [], []>} : vector<8x32xbf16>, vector<32x64xbf16>, vector<8x64xf32> -> vector<8x64xf32>
    %96 = arith.truncf %92#1 : vector<8x32xf32> to vector<8x32xbf16>
    %c32 = arith.constant 32 : index
    %c0_97 = arith.constant 0 : index
    %97 = vector.load %arg13[%c32, %c0_97] : memref<64x64xbf16, #tpu.memory_space<vmem>>, vector<32x64xbf16>
    %cst_98 = arith.constant dense<0.000000e+00> : vector<8x64xf32>
    %98 = tpu.matmul %96, %97, %cst_98 {dimension_numbers = #tpu.dot_dimension_numbers<[1], [0], [0], [1], [0, 0, 1, 1], [], []>} : vector<8x32xbf16>, vector<32x64xbf16>, vector<8x64xf32> -> vector<8x64xf32>
    %99 = arith.addf %95, %98 : vector<8x64xf32>
    %c0_99 = arith.constant 0 : index
    %c0_100 = arith.constant 0 : index
    %100 = vector.load %arg14[%c0_99, %c0_100] : memref<3x64xf32, #tpu.memory_space<vmem>>, vector<1x64xf32>
    %101 = vector.broadcast %100 : vector<1x64xf32> to vector<8x64xf32>
    %102 = arith.addf %99, %101 : vector<8x64xf32>
    %c1_101 = arith.constant 1 : index
    %c0_102 = arith.constant 0 : index
    %103 = vector.load %arg14[%c1_101, %c0_102] : memref<3x64xf32, #tpu.memory_space<vmem>>, vector<1x64xf32>
    %c2_103 = arith.constant 2 : index
    %c0_104 = arith.constant 0 : index
    %104 = vector.load %arg14[%c2_103, %c0_104] : memref<3x64xf32, #tpu.memory_space<vmem>>, vector<1x64xf32>
    %cst_105 = arith.constant dense<0.000000e+00> : vector<8xf32>
    %105 = vector.multi_reduction <add>, %102, %cst_105 [1] : vector<8x64xf32> to vector<8xf32>
    %106 = vector.shape_cast %105 : vector<8xf32> to vector<8x1xf32>
    %cst_106 = arith.constant 6.400000e+01 : f32
    %107 = vector.broadcast %cst_106 : f32 to vector<8x1xf32>
    %108 = arith.divf %106, %107 : vector<8x1xf32>
    %109 = vector.broadcast %108 : vector<8x1xf32> to vector<8x64xf32>
    %110 = arith.subf %102, %109 : vector<8x64xf32>
    %111 = arith.mulf %110, %110 : vector<8x64xf32>
    %cst_107 = arith.constant dense<0.000000e+00> : vector<8xf32>
    %112 = vector.multi_reduction <add>, %111, %cst_107 [1] : vector<8x64xf32> to vector<8xf32>
    %113 = vector.shape_cast %112 : vector<8xf32> to vector<8x1xf32>
    %cst_108 = arith.constant 6.400000e+01 : f32
    %114 = vector.broadcast %cst_108 : f32 to vector<8x1xf32>
    %115 = arith.divf %113, %114 : vector<8x1xf32>
    %116 = vector.broadcast %108 : vector<8x1xf32> to vector<8x64xf32>
    %117 = arith.subf %102, %116 : vector<8x64xf32>
    %cst_109 = arith.constant 9.99999974E-6 : f32
    %118 = vector.broadcast %cst_109 : f32 to vector<8x1xf32>
    %119 = arith.addf %115, %118 : vector<8x1xf32>
    %120 = math.rsqrt %119 : vector<8x1xf32>
    %121 = vector.broadcast %120 : vector<8x1xf32> to vector<8x64xf32>
    %122 = arith.mulf %117, %121 : vector<8x64xf32>
    %123 = vector.broadcast %103 : vector<1x64xf32> to vector<8x64xf32>
    %124 = arith.mulf %122, %123 : vector<8x64xf32>
    %125 = vector.broadcast %104 : vector<1x64xf32> to vector<8x64xf32>
    %126 = arith.addf %124, %125 : vector<8x64xf32>
    %cst_110 = arith.constant 0.000000e+00 : f32
    %127 = vector.broadcast %cst_110 : f32 to vector<8x64xf32>
    %128 = arith.cmpf oge, %126, %127 : vector<8x64xf32>
    %cst_111 = arith.constant 2.000000e-01 : f32
    %129 = vector.broadcast %cst_111 : f32 to vector<8x64xf32>
    %130 = arith.mulf %129, %126 : vector<8x64xf32>
    %131 = arith.select %128, %126, %130 : vector<8x64xi1>, vector<8x64xf32>
    %132 = arith.truncf %131 : vector<8x64xf32> to vector<8x64xbf16>
    %c0_112 = arith.constant 0 : index
    %c0_113 = arith.constant 0 : index
    %133 = vector.load %arg15[%c0_112, %c0_113] : memref<64x32xbf16, #tpu.memory_space<vmem>>, vector<64x32xbf16>
    %cst_114 = arith.constant dense<0.000000e+00> : vector<8x32xf32>
    %134 = tpu.matmul %132, %133, %cst_114 {dimension_numbers = #tpu.dot_dimension_numbers<[1], [0], [0], [1], [0, 0, 1, 1], [], []>} : vector<8x64xbf16>, vector<64x32xbf16>, vector<8x32xf32> -> vector<8x32xf32>
    %c0_115 = arith.constant 0 : index
    %c0_116 = arith.constant 0 : index
    %135 = vector.load %arg16[%c0_115, %c0_116] : memref<3x32xf32, #tpu.memory_space<vmem>>, vector<1x32xf32>
    %136 = vector.broadcast %135 : vector<1x32xf32> to vector<8x32xf32>
    %137 = arith.addf %134, %136 : vector<8x32xf32>
    %c1_117 = arith.constant 1 : index
    %c0_118 = arith.constant 0 : index
    %138 = vector.load %arg16[%c1_117, %c0_118] : memref<3x32xf32, #tpu.memory_space<vmem>>, vector<1x32xf32>
    %c2_119 = arith.constant 2 : index
    %c0_120 = arith.constant 0 : index
    %139 = vector.load %arg16[%c2_119, %c0_120] : memref<3x32xf32, #tpu.memory_space<vmem>>, vector<1x32xf32>
    %cst_121 = arith.constant dense<0.000000e+00> : vector<8xf32>
    %140 = vector.multi_reduction <add>, %137, %cst_121 [1] : vector<8x32xf32> to vector<8xf32>
    %141 = vector.shape_cast %140 : vector<8xf32> to vector<8x1xf32>
    %cst_122 = arith.constant 3.200000e+01 : f32
    %142 = vector.broadcast %cst_122 : f32 to vector<8x1xf32>
    %143 = arith.divf %141, %142 : vector<8x1xf32>
    %144 = vector.broadcast %143 : vector<8x1xf32> to vector<8x32xf32>
    %145 = arith.subf %137, %144 : vector<8x32xf32>
    %146 = arith.mulf %145, %145 : vector<8x32xf32>
    %cst_123 = arith.constant dense<0.000000e+00> : vector<8xf32>
    %147 = vector.multi_reduction <add>, %146, %cst_123 [1] : vector<8x32xf32> to vector<8xf32>
    %148 = vector.shape_cast %147 : vector<8xf32> to vector<8x1xf32>
    %cst_124 = arith.constant 3.200000e+01 : f32
    %149 = vector.broadcast %cst_124 : f32 to vector<8x1xf32>
    %150 = arith.divf %148, %149 : vector<8x1xf32>
    %151 = vector.broadcast %143 : vector<8x1xf32> to vector<8x32xf32>
    %152 = arith.subf %137, %151 : vector<8x32xf32>
    %cst_125 = arith.constant 9.99999974E-6 : f32
    %153 = vector.broadcast %cst_125 : f32 to vector<8x1xf32>
    %154 = arith.addf %150, %153 : vector<8x1xf32>
    %155 = math.rsqrt %154 : vector<8x1xf32>
    %156 = vector.broadcast %155 : vector<8x1xf32> to vector<8x32xf32>
    %157 = arith.mulf %152, %156 : vector<8x32xf32>
    %158 = vector.broadcast %138 : vector<1x32xf32> to vector<8x32xf32>
    %159 = arith.mulf %157, %158 : vector<8x32xf32>
    %160 = vector.broadcast %139 : vector<1x32xf32> to vector<8x32xf32>
    %161 = arith.addf %159, %160 : vector<8x32xf32>
    %cst_126 = arith.constant 0.000000e+00 : f32
    %162 = vector.broadcast %cst_126 : f32 to vector<8x32xf32>
    %163 = arith.cmpf oge, %161, %162 : vector<8x32xf32>
    %cst_127 = arith.constant 2.000000e-01 : f32
    %164 = vector.broadcast %cst_127 : f32 to vector<8x32xf32>
    %165 = arith.mulf %164, %161 : vector<8x32xf32>
    %166 = arith.select %163, %161, %165 : vector<8x32xi1>, vector<8x32xf32>
    %167 = arith.truncf %166 : vector<8x32xf32> to vector<8x32xbf16>
    %c0_128 = arith.constant 0 : index
    %c0_129 = arith.constant 0 : index
    %168 = vector.load %arg17[%c0_128, %c0_129] : memref<32x16xbf16, #tpu.memory_space<vmem>>, vector<32x16xbf16>
    %cst_130 = arith.constant dense<0.000000e+00> : vector<8x16xf32>
    %169 = tpu.matmul %167, %168, %cst_130 {dimension_numbers = #tpu.dot_dimension_numbers<[1], [0], [0], [1], [0, 0, 1, 1], [], []>} : vector<8x32xbf16>, vector<32x16xbf16>, vector<8x16xf32> -> vector<8x16xf32>
    %c0_131 = arith.constant 0 : index
    %c0_132 = arith.constant 0 : index
    %170 = vector.load %arg18[%c0_131, %c0_132] : memref<3x16xf32, #tpu.memory_space<vmem>>, vector<1x16xf32>
    %171 = vector.broadcast %170 : vector<1x16xf32> to vector<8x16xf32>
    %172 = arith.addf %169, %171 : vector<8x16xf32>
    %c1_133 = arith.constant 1 : index
    %c0_134 = arith.constant 0 : index
    %173 = vector.load %arg18[%c1_133, %c0_134] : memref<3x16xf32, #tpu.memory_space<vmem>>, vector<1x16xf32>
    %c2_135 = arith.constant 2 : index
    %c0_136 = arith.constant 0 : index
    %174 = vector.load %arg18[%c2_135, %c0_136] : memref<3x16xf32, #tpu.memory_space<vmem>>, vector<1x16xf32>
    %cst_137 = arith.constant dense<0.000000e+00> : vector<8xf32>
    %175 = vector.multi_reduction <add>, %172, %cst_137 [1] : vector<8x16xf32> to vector<8xf32>
    %176 = vector.shape_cast %175 : vector<8xf32> to vector<8x1xf32>
    %cst_138 = arith.constant 1.600000e+01 : f32
    %177 = vector.broadcast %cst_138 : f32 to vector<8x1xf32>
    %178 = arith.divf %176, %177 : vector<8x1xf32>
    %179 = vector.broadcast %178 : vector<8x1xf32> to vector<8x16xf32>
    %180 = arith.subf %172, %179 : vector<8x16xf32>
    %181 = arith.mulf %180, %180 : vector<8x16xf32>
    %cst_139 = arith.constant dense<0.000000e+00> : vector<8xf32>
    %182 = vector.multi_reduction <add>, %181, %cst_139 [1] : vector<8x16xf32> to vector<8xf32>
    %183 = vector.shape_cast %182 : vector<8xf32> to vector<8x1xf32>
    %cst_140 = arith.constant 1.600000e+01 : f32
    %184 = vector.broadcast %cst_140 : f32 to vector<8x1xf32>
    %185 = arith.divf %183, %184 : vector<8x1xf32>
    %186 = vector.broadcast %178 : vector<8x1xf32> to vector<8x16xf32>
    %187 = arith.subf %172, %186 : vector<8x16xf32>
    %cst_141 = arith.constant 9.99999974E-6 : f32
    %188 = vector.broadcast %cst_141 : f32 to vector<8x1xf32>
    %189 = arith.addf %185, %188 : vector<8x1xf32>
    %190 = math.rsqrt %189 : vector<8x1xf32>
    %191 = vector.broadcast %190 : vector<8x1xf32> to vector<8x16xf32>
    %192 = arith.mulf %187, %191 : vector<8x16xf32>
    %193 = vector.broadcast %173 : vector<1x16xf32> to vector<8x16xf32>
    %194 = arith.mulf %192, %193 : vector<8x16xf32>
    %195 = vector.broadcast %174 : vector<1x16xf32> to vector<8x16xf32>
    %196 = arith.addf %194, %195 : vector<8x16xf32>
    %cst_142 = arith.constant 0.000000e+00 : f32
    %197 = vector.broadcast %cst_142 : f32 to vector<8x16xf32>
    %198 = arith.cmpf oge, %196, %197 : vector<8x16xf32>
    %cst_143 = arith.constant 2.000000e-01 : f32
    %199 = vector.broadcast %cst_143 : f32 to vector<8x16xf32>
    %200 = arith.mulf %199, %196 : vector<8x16xf32>
    %201 = arith.select %198, %196, %200 : vector<8x16xi1>, vector<8x16xf32>
    %202 = arith.truncf %201 : vector<8x16xf32> to vector<8x16xbf16>
    %c0_144 = arith.constant 0 : index
    %c0_145 = arith.constant 0 : index
    %203 = vector.load %arg19[%c0_144, %c0_145] : memref<16x128xbf16, #tpu.memory_space<vmem>>, vector<16x128xbf16>
    %cst_146 = arith.constant dense<0.000000e+00> : vector<8x128xf32>
    %204 = tpu.matmul %202, %203, %cst_146 {dimension_numbers = #tpu.dot_dimension_numbers<[1], [0], [0], [1], [0, 0, 1, 1], [], []>} : vector<8x16xbf16>, vector<16x128xbf16>, vector<8x128xf32> -> vector<8x128xf32>
    %c0_147 = arith.constant 0 : index
    %c0_148 = arith.constant 0 : index
    %205 = vector.load %arg20[%c0_147, %c0_148] : memref<1x128xf32, #tpu.memory_space<vmem>>, vector<1x128xf32>
    %206 = vector.broadcast %205 : vector<1x128xf32> to vector<8x128xf32>
    %207 = arith.addf %204, %206 : vector<8x128xf32>
    %c0_149 = arith.constant 0 : index
    %c0_150 = arith.constant 0 : index
    %208 = vector.load %arg21[%c0_149, %c0_150] : memref<8x128xf32, #tpu.memory_space<vmem>>, vector<8x128xf32>
    tpu.vector_store %arg21[%c0_149, %c0_150], %207 {strides = array<i32>} : memref<8x128xf32, #tpu.memory_space<vmem>>, vector<8x128xf32>,
    return
  }
}

</mosaic_0001>

<llo_original>
// kernel: guo_len_est_forward.1
$region0: #{guo_len_est_forward.1}
  #allocation0 [shape = 'u32[]', space=smem, size = 0x4, offset = 0x4, fixed_abs, tag = 'smem constant byte address 0x4 - core index']
  #allocation1 [shape = 'u32[72,128]{1,0:T(1,128)}', space=vmem, size = 0x9000, scoped, tag = 'internal scratch']
  #allocation2 [shape = 'f32[64,32]{1,0:T(8,128)}', space=vmem, size = 0x8000, scoped, tag = 'scratch operand']
  #allocation3 [shape = 'f32[64,32]{1,0:T(8,128)}', space=vmem, size = 0x8000, scoped, tag = 'scratch operand']
  #allocation4 [shape = 'f32[64,32]{1,0:T(8,128)}', space=vmem, size = 0x8000, scoped, tag = 'scratch operand']
  #allocation5 [shape = 'f32[64,32]{1,0:T(8,128)}', space=vmem, size = 0x8000, scoped, tag = 'scratch operand']
  #allocation6 [shape = 'f32[64,32]{1,0:T(8,128)}', space=vmem, size = 0x8000, scoped, tag = 'scratch operand']
  #allocation7 [shape = 'f32[64,32]{1,0:T(8,128)}', space=vmem, size = 0x8000, scoped, tag = 'scratch operand']
  #allocation8 [shape = 's32[1]{0:T(128)S(6)}', space=smem, size = 0x200, scoped, tag = 'scoped memory for guo_len_est_forward.1']
  %s0 = inlined_call_operand.<no memory space> [shape: s32[1], index: 0, kind: input, shape index: {}]
  %s1 = inlined_call_operand.vmem [shape: s32[8,1], index: 1, kind: input, shape index: {}]
  %s2 = inlined_call_operand.vmem [shape: bf16[64,32], index: 2, kind: input, shape index: {}]
  %s3 = inlined_call_operand.vmem [shape: bf16[64,16], index: 3, kind: input, shape index: {}]
  %s4 = inlined_call_operand.vmem [shape: bf16[16,32], index: 4, kind: input, shape index: {}]
  %s5 = inlined_call_operand.vmem [shape: f32[1,32], index: 5, kind: input, shape index: {}]
  %s6 = inlined_call_operand.vmem [shape: bf16[32,32], index: 6, kind: input, shape index: {}]
  %s7 = inlined_call_operand.vmem [shape: f32[1,32], index: 7, kind: input, shape index: {}]
  %s8 = inlined_call_operand.vmem [shape: bf16[6,32,32], index: 8, kind: input, shape index: {}]
  %s9 = inlined_call_operand.vmem [shape: bf16[6,32,32], index: 9, kind: input, shape index: {}]
  %s10 = inlined_call_operand.vmem [shape: f32[6,1,32], index: 10, kind: input, shape index: {}]
  %s11 = inlined_call_operand.vmem [shape: f32[2,1,32], index: 11, kind: input, shape index: {}]
  %s12 = inlined_call_operand.vmem [shape: f32[2,1,32], index: 12, kind: input, shape index: {}]
  %s13 = inlined_call_operand.vmem [shape: bf16[64,64], index: 13, kind: input, shape index: {}]
  %s14 = inlined_call_operand.vmem [shape: f32[3,64], index: 14, kind: input, shape index: {}]
  %s15 = inlined_call_operand.vmem [shape: bf16[64,32], index: 15, kind: input, shape index: {}]
  %s16 = inlined_call_operand.vmem [shape: f32[3,32], index: 16, kind: input, shape index: {}]
  %s17 = inlined_call_operand.vmem [shape: bf16[32,16], index: 17, kind: input, shape index: {}]
  %s18 = inlined_call_operand.vmem [shape: f32[3,16], index: 18, kind: input, shape index: {}]
  %s19 = inlined_call_operand.vmem [shape: bf16[16,128], index: 19, kind: input, shape index: {}]
  %s20 = inlined_call_operand.vmem [shape: f32[1,128], index: 20, kind: input, shape index: {}]
  %s21 = inlined_call_operand.vmem [shape: f32[8,128], index: 21, kind: output, shape index: {}]
  %s22 = sld [smem:[#allocation0]]
  $region101: #{guo_len_est_forward.1} parent=0
    _
  %s24 = ssub.s32 1, %s22
  %s25 = scalar_select 0, %s24, %s22
  %26 = sst [smem:[#allocation8]] %s0
  // Predicated region
  $region2: #{guo_len_est_forward.1} parent=0 // pred_check
    _
  $region3: #{guo_len_est_forward.1} parent=0 // pred_check_branch
    %28 = sbr.rel (0) target = $region5
  $region4: #{guo_len_est_forward.1} parent=0 // pred_region
    _
  $region5: #{guo_len_est_forward.1} parent=0 // pred_fallthru
    _
  // Predicated region
  $region6: #{guo_len_est_forward.1} parent=0 // pred_check
    _
  $region7: #{guo_len_est_forward.1} parent=0 // pred_check_branch
    %30 = sbr.rel (0) target = $region9
  $region8: #{guo_len_est_forward.1} parent=0 // pred_region
    _
  $region9: #{guo_len_est_forward.1} parent=0 // pred_fallthru
    _
  // Predicated region
  $region10: #{guo_len_est_forward.1} parent=0 // pred_check
    _
  $region11: #{guo_len_est_forward.1} parent=0 // pred_check_branch
    %32 = sbr.rel (0) target = $region13
  $region12: #{guo_len_est_forward.1} parent=0 // pred_region
    _
  $region13: #{guo_len_est_forward.1} parent=0 // pred_fallthru
    _
  // Predicated region
  $region14: #{guo_len_est_forward.1} parent=0 // pred_check
    _
  $region15: #{guo_len_est_forward.1} parent=0 // pred_check_branch
    %34 = sbr.rel (0) target = $region17
  $region16: #{guo_len_est_forward.1} parent=0 // pred_region
    _
  $region17: #{guo_len_est_forward.1} parent=0 // pred_fallthru
    _
  // Predicated region
  $region18: #{guo_len_est_forward.1} parent=0 // pred_check
    _
  $region19: #{guo_len_est_forward.1} parent=0 // pred_check_branch
    %36 = sbr.rel (0) target = $region21
  $region20: #{guo_len_est_forward.1} parent=0 // pred_region
    _
  $region21: #{guo_len_est_forward.1} parent=0 // pred_fallthru
    _
  // Predicated region
  $region22: #{guo_len_est_forward.1} parent=0 // pred_check
    _
  $region23: #{guo_len_est_forward.1} parent=0 // pred_check_branch
    %38 = sbr.rel (0) target = $region25
  $region24: #{guo_len_est_forward.1} parent=0 // pred_region
    _
  $region25: #{guo_len_est_forward.1} parent=0 // pred_fallthru
    _
  // Predicated region
  $region26: #{guo_len_est_forward.1} parent=0 // pred_check
    _
  $region27: #{guo_len_est_forward.1} parent=0 // pred_check_branch
    %40 = sbr.rel (0) target = $region29
  $region28: #{guo_len_est_forward.1} parent=0 // pred_region
    _
  $region29: #{guo_len_est_forward.1} parent=0 // pred_fallthru
    _
  // Predicated region
  $region30: #{guo_len_est_forward.1} parent=0 // pred_check
    _
  $region31: #{guo_len_est_forward.1} parent=0 // pred_check_branch
    %42 = sbr.rel (0) target = $region33
  $region32: #{guo_len_est_forward.1} parent=0 // pred_region
    _
  $region33: #{guo_len_est_forward.1} parent=0 // pred_fallthru
    _
  // Predicated region
  $region34: #{guo_len_est_forward.1} parent=0 // pred_check
    _
  $region35: #{guo_len_est_forward.1} parent=0 // pred_check_branch
    %44 = sbr.rel (0) target = $region37
  $region36: #{guo_len_est_forward.1} parent=0 // pred_region
    _
  $region37: #{guo_len_est_forward.1} parent=0 // pred_fallthru
    _
  // Predicated region
  $region38: #{guo_len_est_forward.1} parent=0 // pred_check
    _
  $region39: #{guo_len_est_forward.1} parent=0 // pred_check_branch
    %46 = sbr.rel (0) target = $region41
  $region40: #{guo_len_est_forward.1} parent=0 // pred_region
    _
  $region41: #{guo_len_est_forward.1} parent=0 // pred_fallthru
    _
  // Predicated region
  $region42: #{guo_len_est_forward.1} parent=0 // pred_check
    _
  $region43: #{guo_len_est_forward.1} parent=0 // pred_check_branch
    %48 = sbr.rel (0) target = $region45
  $region44: #{guo_len_est_forward.1} parent=0 // pred_region
    _
  $region45: #{guo_len_est_forward.1} parent=0 // pred_fallthru
    _
  // Predicated region
  $region46: #{guo_len_est_forward.1} parent=0 // pred_check
    _
  $region47: #{guo_len_est_forward.1} parent=0 // pred_check_branch
    %50 = sbr.rel (0) target = $region49
  $region48: #{guo_len_est_forward.1} parent=0 // pred_region
    _
  $region49: #{guo_len_est_forward.1} parent=0 // pred_fallthru
    _
  // Predicated region
  $region50: #{guo_len_est_forward.1} parent=0 // pred_check
    _
  $region51: #{guo_len_est_forward.1} parent=0 // pred_check_branch
    %52 = sbr.rel (0) target = $region53
  $region52: #{guo_len_est_forward.1} parent=0 // pred_region
    _
  $region53: #{guo_len_est_forward.1} parent=0 // pred_fallthru
    _
  // Predicated region
  $region54: #{guo_len_est_forward.1} parent=0 // pred_check
    _
  $region55: #{guo_len_est_forward.1} parent=0 // pred_check_branch
    %54 = sbr.rel (0) target = $region57
  $region56: #{guo_len_est_forward.1} parent=0 // pred_region
    _
  $region57: #{guo_len_est_forward.1} parent=0 // pred_fallthru
    _
  // Predicated region
  $region58: #{guo_len_est_forward.1} parent=0 // pred_check
    _
  $region59: #{guo_len_est_forward.1} parent=0 // pred_check_branch
    %56 = sbr.rel (0) target = $region61
  $region60: #{guo_len_est_forward.1} parent=0 // pred_region
    _
  $region61: #{guo_len_est_forward.1} parent=0 // pred_fallthru
    _
  // Predicated region
  $region62: #{guo_len_est_forward.1} parent=0 // pred_check
    _
  $region63: #{guo_len_est_forward.1} parent=0 // pred_check_branch
    %58 = sbr.rel (0) target = $region65
  $region64: #{guo_len_est_forward.1} parent=0 // pred_region
    _
  $region65: #{guo_len_est_forward.1} parent=0 // pred_fallthru
    _
  // Predicated region
  $region66: #{guo_len_est_forward.1} parent=0 // pred_check
    _
  $region67: #{guo_len_est_forward.1} parent=0 // pred_check_branch
    %60 = sbr.rel (0) target = $region69
  $region68: #{guo_len_est_forward.1} parent=0 // pred_region
    _
  $region69: #{guo_len_est_forward.1} parent=0 // pred_fallthru
    _
  // Predicated region
  $region70: #{guo_len_est_forward.1} parent=0 // pred_check
    _
  $region71: #{guo_len_est_forward.1} parent=0 // pred_check_branch
    %62 = sbr.rel (0) target = $region73
  $region72: #{guo_len_est_forward.1} parent=0 // pred_region
    _
  $region73: #{guo_len_est_forward.1} parent=0 // pred_fallthru
    _
  // Predicated region
  $region74: #{guo_len_est_forward.1} parent=0 // pred_check
    _
  $region75: #{guo_len_est_forward.1} parent=0 // pred_check_branch
    %64 = sbr.rel (0) target = $region77
  $region76: #{guo_len_est_forward.1} parent=0 // pred_region
    _
  $region77: #{guo_len_est_forward.1} parent=0 // pred_fallthru
    _
  // Predicated region
  $region78: #{guo_len_est_forward.1} parent=0 // pred_check
    _
  $region79: #{guo_len_est_forward.1} parent=0 // pred_check_branch
    %66 = sbr.rel (0) target = $region81
  $region80: #{guo_len_est_forward.1} parent=0 // pred_region
    _
  $region81: #{guo_len_est_forward.1} parent=0 // pred_fallthru
    _
  // Predicated region
  $region82: #{guo_len_est_forward.1} parent=0 // pred_check
    _
  $region83: #{guo_len_est_forward.1} parent=0 // pred_check_branch
    %68 = sbr.rel (0) target = $region85
  $region84: #{guo_len_est_forward.1} parent=0 // pred_region
    _
  $region85: #{guo_len_est_forward.1} parent=0 // pred_fallthru
    _
  %v70 = vld [vmem:[%s3] sm:$0xf]
  %v71 = vld [vmem:[%s3 + $0x4] sm:$0xf]
  %v72 = vld [vmem:[%s3 + $0x8] sm:$0xf]
  %v73 = vld [vmem:[%s3 + $0xc] sm:$0xf]
  %v74 = vld [vmem:[%s3 + $0x10] sm:$0xf]
  %v75 = vld [vmem:[%s3 + $0x14] sm:$0xf]
  %v76 = vld [vmem:[%s3 + $0x18] sm:$0xf]
  %v77 = vld [vmem:[%s3 + $0x1c] sm:$0xf]
  %v78 = vld [vmem:[%s4] sm:$0xf]
  %v79 = vld [vmem:[%s4 + $0x4] sm:$0xf]
  %v80 = vld [vmem:[%s5] sm:$0x1]
  %v82 = vperm.slane %v80, 0
  %v92 = vunpack.c.l.b16 %v70
  %v93 = vunpack.c.l.b16 %v71
  %v94 = vunpack.c.l.b16 %v72
  %v95 = vunpack.c.l.b16 %v73
  %v96 = vunpack.c.l.b16 %v74
  %v97 = vunpack.c.l.b16 %v75
  %v98 = vunpack.c.l.b16 %v76
  %v99 = vunpack.c.l.b16 %v77
  %v100 = vpack.c.b16 %v93, %v92
  %v101 = vpack.c.b16 %v95, %v94
  %v102 = vpack.c.b16 %v97, %v96
  %v103 = vpack.c.b16 %v99, %v98
  %v106 = vunpack.c.l.b16 %v78
  %v107 = vunpack.c.l.b16 %v79
  %v108 = vpack.c.b16 %v107, %v106
  %vm110 = vcmask 130048
  %v112 = vsel %vm110, %v100, 0
  %v115 = vsel %vm110, %v101, 0
  %v118 = vsel %vm110, %v102, 0
  %v121 = vsel %vm110, %v103, 0
  %123 = vmatpush.bf16.msra.mxu0 0
  %124 = vmatpush.bf16.msra.mxu0 0
  %125 = vmatpush.bf16.msra.mxu0 0
  %126 = vmatpush.bf16.msra.mxu0 0
  %127 = vmatpush.bf16.msra.mxu0 0
  %128 = vmatpush.bf16.msra.mxu0 0
  %129 = vmatpush.bf16.msra.mxu0 0
  %130 = vmatpush.bf16.msra.mxu0 %v108
  %131 = vmatmul.bf16.gmra.mxu0 %v112
  %v132 = vpop.f32.mrf.mxu0
  %v133 = vadd.f32 %v82, %v132
  %v134 = vpop.f32.mrf.mxu0
  %v135 = vadd.f32 %v82, %v134
  %136 = vmatmul.bf16.gmra.mxu0 %v115
  %v137 = vpop.f32.mrf.mxu0
  %v138 = vadd.f32 %v82, %v137
  %v139 = vpop.f32.mrf.mxu0
  %v140 = vadd.f32 %v82, %v139
  %141 = vmatmul.bf16.gmra.mxu0 %v118
  %v142 = vpop.f32.mrf.mxu0
  %v143 = vadd.f32 %v82, %v142
  %v144 = vpop.f32.mrf.mxu0
  %v145 = vadd.f32 %v82, %v144
  %146 = vmatmul.bf16.gmra.mxu0 %v121
  %v147 = vpop.f32.mrf.mxu0
  %v148 = vadd.f32 %v82, %v147
  %v149 = vpop.f32.mrf.mxu0
  %v150 = vadd.f32 %v82, %v149
  %151 = vdwg.mxu0
  %v152 = vld [vmem:[%s2] sm:$0xf]
  %v153 = vld [vmem:[%s2 + $0x4] sm:$0xf]
  %v154 = vld [vmem:[%s2 + $0x8] sm:$0xf]
  %v155 = vld [vmem:[%s2 + $0xc] sm:$0xf]
  %v156 = vld [vmem:[%s2 + $0x10] sm:$0xf]
  %v157 = vld [vmem:[%s2 + $0x14] sm:$0xf]
  %v158 = vld [vmem:[%s2 + $0x18] sm:$0xf]
  %v159 = vld [vmem:[%s2 + $0x1c] sm:$0xf]
  %v160 = vunpack.c.l.bf16 %v152
  %v161 = vunpack.c.l.bf16 %v153
  %v162 = vunpack.c.l.bf16 %v154
  %v163 = vunpack.c.l.bf16 %v155
  %v164 = vunpack.c.l.bf16 %v156
  %v165 = vunpack.c.l.bf16 %v157
  %v166 = vunpack.c.l.bf16 %v158
  %v167 = vunpack.c.l.bf16 %v159
  %v168 = vadd.f32 %v160, %v133
  %v169 = vadd.f32 %v161, %v135
  %v170 = vadd.f32 %v162, %v138
  %v171 = vadd.f32 %v163, %v140
  %v172 = vadd.f32 %v164, %v143
  %v173 = vadd.f32 %v165, %v145
  %v174 = vadd.f32 %v166, %v148
  %v175 = vadd.f32 %v167, %v150
  %v176 = vpack.c.bf16 %v169, %v168
  %v177 = vpack.c.bf16 %v171, %v170
  %v178 = vpack.c.bf16 %v173, %v172
  %v179 = vpack.c.bf16 %v175, %v174
  %v180 = vld [vmem:[%s6] sm:$0xf]
  %v181 = vld [vmem:[%s6 + $0x4] sm:$0xf]
  %v182 = vld [vmem:[%s6 + $0x8] sm:$0xf]
  %v183 = vld [vmem:[%s6 + $0xc] sm:$0xf]
  %v184 = vld [vmem:[%s7] sm:$0x1]
  %v186 = vperm.slane %v184, 0
  %v192 = vunpack.c.l.b16 %v180
  %v193 = vunpack.c.l.b16 %v181
  %v194 = vunpack.c.l.b16 %v182
  %v195 = vunpack.c.l.b16 %v183
  %v196 = vpack.c.b16 %v193, %v192
  %v197 = vpack.c.b16 %v195, %v194
  %vm200 = vcmask 261120
  %v202 = vsel %vm200, %v176, 0
  %v205 = vsel %vm200, %v177, 0
  %v208 = vsel %vm200, %v178, 0
  %v211 = vsel %vm200, %v179, 0
  %213 = vmatpush.bf16.msra.mxu0 0
  %214 = vmatpush.bf16.msra.mxu0 0
  %215 = vmatpush.bf16.msra.mxu0 0
  %216 = vmatpush.bf16.msra.mxu0 0
  %217 = vmatpush.bf16.msra.mxu0 0
  %218 = vmatpush.bf16.msra.mxu0 0
  %219 = vmatpush.bf16.msra.mxu0 %v197
  %220 = vmatpush.bf16.msra.mxu0 %v196
  %221 = vmatmul.bf16.gmra.mxu0 %v202
  %v222 = vpop.f32.mrf.mxu0
  %v223 = vadd.f32 %v186, %v222
  %v224 = vpop.f32.mrf.mxu0
  %v225 = vadd.f32 %v186, %v224
  %226 = vmatmul.bf16.gmra.mxu0 %v205
  %v227 = vpop.f32.mrf.mxu0
  %v228 = vadd.f32 %v186, %v227
  %v229 = vpop.f32.mrf.mxu0
  %v230 = vadd.f32 %v186, %v229
  %231 = vmatmul.bf16.gmra.mxu0 %v208
  %v232 = vpop.f32.mrf.mxu0
  %v233 = vadd.f32 %v186, %v232
  %v234 = vpop.f32.mrf.mxu0
  %v235 = vadd.f32 %v186, %v234
  %236 = vmatmul.bf16.gmra.mxu0 %v211
  %v237 = vpop.f32.mrf.mxu0
  %v238 = vadd.f32 %v186, %v237
  %v239 = vpop.f32.mrf.mxu0
  %v240 = vadd.f32 %v186, %v239
  %241 = vdwg.mxu0
  %v242 = vpack.c.bf16 %v225, %v223
  %v243 = vpack.c.bf16 %v230, %v228
  %v244 = vpack.c.bf16 %v235, %v233
  %v245 = vpack.c.bf16 %v240, %v238
  %v246 = vld [vmem:[%s8] sm:$0xf]
  %v247 = vld [vmem:[%s8 + $0x4] sm:$0xf]
  %v248 = vld [vmem:[%s8 + $0x8] sm:$0xf]
  %v249 = vld [vmem:[%s8 + $0xc] sm:$0xf]
  %v250 = vld [vmem:[%s10] sm:$0x1]
  %v252 = vperm.slane %v250, 0
  %v258 = vunpack.c.l.b16 %v246
  %v259 = vunpack.c.l.b16 %v247
  %v260 = vunpack.c.l.b16 %v248
  %v261 = vunpack.c.l.b16 %v249
  %v262 = vpack.c.b16 %v259, %v258
  %v263 = vpack.c.b16 %v261, %v260
  %v267 = vsel %vm200, %v242, 0
  %v270 = vsel %vm200, %v243, 0
  %v273 = vsel %vm200, %v244, 0
  %v276 = vsel %vm200, %v245, 0
  %278 = vmatpush.bf16.msra.mxu0 0
  %279 = vmatpush.bf16.msra.mxu0 0
  %280 = vmatpush.bf16.msra.mxu0 0
  %281 = vmatpush.bf16.msra.mxu0 0
  %282 = vmatpush.bf16.msra.mxu0 0
  %283 = vmatpush.bf16.msra.mxu0 0
  %284 = vmatpush.bf16.msra.mxu0 %v263
  %285 = vmatpush.bf16.msra.mxu0 %v262
  %286 = vmatmul.bf16.gmra.mxu0 %v267
  %v287 = vpop.f32.mrf.mxu0
  %v288 = vadd.f32 %v252, %v287
  %v289 = vpop.f32.mrf.mxu0
  %v290 = vadd.f32 %v252, %v289
  %291 = vmatmul.bf16.gmra.mxu0 %v270
  %v292 = vpop.f32.mrf.mxu0
  %v293 = vadd.f32 %v252, %v292
  %v294 = vpop.f32.mrf.mxu0
  %v295 = vadd.f32 %v252, %v294
  %296 = vmatmul.bf16.gmra.mxu0 %v273
  %v297 = vpop.f32.mrf.mxu0
  %v298 = vadd.f32 %v252, %v297
  %v299 = vpop.f32.mrf.mxu0
  %v300 = vadd.f32 %v252, %v299
  %301 = vmatmul.bf16.gmra.mxu0 %v276
  %v302 = vpop.f32.mrf.mxu0
  %v303 = vadd.f32 %v252, %v302
  %v304 = vpop.f32.mrf.mxu0
  %v305 = vadd.f32 %v252, %v304
  %306 = vdwg.mxu0
  %307 = vst.msk [vmem:[#allocation2] sm:$0xff] %vm200, %v288
  %308 = vst.msk [vmem:[#allocation2 + $0x8] sm:$0xff] %vm200, %v290
  %309 = vst.msk [vmem:[#allocation2 + $0x10] sm:$0xff] %vm200, %v293
  %310 = vst.msk [vmem:[#allocation2 + $0x18] sm:$0xff] %vm200, %v295
  %311 = vst.msk [vmem:[#allocation2 + $0x20] sm:$0xff] %vm200, %v298
  %312 = vst.msk [vmem:[#allocation2 + $0x28] sm:$0xff] %vm200, %v300
  %313 = vst.msk [vmem:[#allocation2 + $0x30] sm:$0xff] %vm200, %v303
  %314 = vst.msk [vmem:[#allocation2 + $0x38] sm:$0xff] %vm200, %v305
  %s315 = scalar_lea.vmem %s8, 16
  %v316 = vld [vmem:[%s315] sm:$0xf]
  %v317 = vld [vmem:[%s315 + $0x4] sm:$0xf]
  %v318 = vld [vmem:[%s315 + $0x8] sm:$0xf]
  %v319 = vld [vmem:[%s315 + $0xc] sm:$0xf]
  %s320 = scalar_lea.vmem %s10, 1
  %v321 = vld [vmem:[%s320] sm:$0x1]
  %v323 = vperm.slane %v321, 0
  %v329 = vunpack.c.l.b16 %v316
  %v330 = vunpack.c.l.b16 %v317
  %v331 = vunpack.c.l.b16 %v318
  %v332 = vunpack.c.l.b16 %v319
  %v333 = vpack.c.b16 %v330, %v329
  %v334 = vpack.c.b16 %v332, %v331
  %337 = vmatpush.bf16.msra.mxu0 0
  %338 = vmatpush.bf16.msra.mxu0 0
  %339 = vmatpush.bf16.msra.mxu0 0
  %340 = vmatpush.bf16.msra.mxu0 0
  %341 = vmatpush.bf16.msra.mxu0 0
  %342 = vmatpush.bf16.msra.mxu0 0
  %343 = vmatpush.bf16.msra.mxu0 %v334
  %344 = vmatpush.bf16.msra.mxu0 %v333
  %345 = vmatmul.bf16.gmra.mxu0 %v267
  %v346 = vpop.f32.mrf.mxu0
  %v347 = vadd.f32 %v323, %v346
  %v348 = vpop.f32.mrf.mxu0
  %v349 = vadd.f32 %v323, %v348
  %350 = vmatmul.bf16.gmra.mxu0 %v270
  %v351 = vpop.f32.mrf.mxu0
  %v352 = vadd.f32 %v323, %v351
  %v353 = vpop.f32.mrf.mxu0
  %v354 = vadd.f32 %v323, %v353
  %355 = vmatmul.bf16.gmra.mxu0 %v273
  %v356 = vpop.f32.mrf.mxu0
  %v357 = vadd.f32 %v323, %v356
  %v358 = vpop.f32.mrf.mxu0
  %v359 = vadd.f32 %v323, %v358
  %360 = vmatmul.bf16.gmra.mxu0 %v276
  %v361 = vpop.f32.mrf.mxu0
  %v362 = vadd.f32 %v323, %v361
  %v363 = vpop.f32.mrf.mxu0
  %v364 = vadd.f32 %v323, %v363
  %365 = vdwg.mxu0
  %366 = vst.msk [vmem:[#allocation3] sm:$0xff] %vm200, %v347
  %367 = vst.msk [vmem:[#allocation3 + $0x8] sm:$0xff] %vm200, %v349
  %368 = vst.msk [vmem:[#allocation3 + $0x10] sm:$0xff] %vm200, %v352
  %369 = vst.msk [vmem:[#allocation3 + $0x18] sm:$0xff] %vm200, %v354
  %370 = vst.msk [vmem:[#allocation3 + $0x20] sm:$0xff] %vm200, %v357
  %371 = vst.msk [vmem:[#allocation3 + $0x28] sm:$0xff] %vm200, %v359
  %372 = vst.msk [vmem:[#allocation3 + $0x30] sm:$0xff] %vm200, %v362
  %373 = vst.msk [vmem:[#allocation3 + $0x38] sm:$0xff] %vm200, %v364
  %s374 = scalar_lea.vmem %s8, 32
  %v375 = vld [vmem:[%s374] sm:$0xf]
  %v376 = vld [vmem:[%s374 + $0x4] sm:$0xf]
  %v377 = vld [vmem:[%s374 + $0x8] sm:$0xf]
  %v378 = vld [vmem:[%s374 + $0xc] sm:$0xf]
  %s379 = scalar_lea.vmem %s10, 2
  %v380 = vld [vmem:[%s379] sm:$0x1]
  %v382 = vperm.slane %v380, 0
  %v388 = vunpack.c.l.b16 %v375
  %v389 = vunpack.c.l.b16 %v376
  %v390 = vunpack.c.l.b16 %v377
  %v391 = vunpack.c.l.b16 %v378
  %v392 = vpack.c.b16 %v389, %v388
  %v393 = vpack.c.b16 %v391, %v390
  %396 = vmatpush.bf16.msra.mxu0 0
  %397 = vmatpush.bf16.msra.mxu0 0
  %398 = vmatpush.bf16.msra.mxu0 0
  %399 = vmatpush.bf16.msra.mxu0 0
  %400 = vmatpush.bf16.msra.mxu0 0
  %401 = vmatpush.bf16.msra.mxu0 0
  %402 = vmatpush.bf16.msra.mxu0 %v393
  %403 = vmatpush.bf16.msra.mxu0 %v392
  %404 = vmatmul.bf16.gmra.mxu0 %v267
  %v405 = vpop.f32.mrf.mxu0
  %v406 = vadd.f32 %v382, %v405
  %v407 = vpop.f32.mrf.mxu0
  %v408 = vadd.f32 %v382, %v407
  %409 = vmatmul.bf16.gmra.mxu0 %v270
  %v410 = vpop.f32.mrf.mxu0
  %v411 = vadd.f32 %v382, %v410
  %v412 = vpop.f32.mrf.mxu0
  %v413 = vadd.f32 %v382, %v412
  %414 = vmatmul.bf16.gmra.mxu0 %v273
  %v415 = vpop.f32.mrf.mxu0
  %v416 = vadd.f32 %v382, %v415
  %v417 = vpop.f32.mrf.mxu0
  %v418 = vadd.f32 %v382, %v417
  %419 = vmatmul.bf16.gmra.mxu0 %v276
  %v420 = vpop.f32.mrf.mxu0
  %v421 = vadd.f32 %v382, %v420
  %v422 = vpop.f32.mrf.mxu0
  %v423 = vadd.f32 %v382, %v422
  %424 = vdwg.mxu0
  %425 = vst.msk [vmem:[#allocation4] sm:$0xff] %vm200, %v406
  %426 = vst.msk [vmem:[#allocation4 + $0x8] sm:$0xff] %vm200, %v408
  %427 = vst.msk [vmem:[#allocation4 + $0x10] sm:$0xff] %vm200, %v411
  %428 = vst.msk [vmem:[#allocation4 + $0x18] sm:$0xff] %vm200, %v413
  %429 = vst.msk [vmem:[#allocation4 + $0x20] sm:$0xff] %vm200, %v416
  %430 = vst.msk [vmem:[#allocation4 + $0x28] sm:$0xff] %vm200, %v418
  %431 = vst.msk [vmem:[#allocation4 + $0x30] sm:$0xff] %vm200, %v421
  %432 = vst.msk [vmem:[#allocation4 + $0x38] sm:$0xff] %vm200, %v423
  %s433 = scalar_lea.vmem %s8, 48
  %v434 = vld [vmem:[%s433] sm:$0xf]
  %v435 = vld [vmem:[%s433 + $0x4] sm:$0xf]
  %v436 = vld [vmem:[%s433 + $0x8] sm:$0xf]
  %v437 = vld [vmem:[%s433 + $0xc] sm:$0xf]
  %s438 = scalar_lea.vmem %s10, 3
  %v439 = vld [vmem:[%s438] sm:$0x1]
  %v441 = vperm.slane %v439, 0
  %v447 = vunpack.c.l.b16 %v434
  %v448 = vunpack.c.l.b16 %v435
  %v449 = vunpack.c.l.b16 %v436
  %v450 = vunpack.c.l.b16 %v437
  %v451 = vpack.c.b16 %v448, %v447
  %v452 = vpack.c.b16 %v450, %v449
  %455 = vmatpush.bf16.msra.mxu0 0
  %456 = vmatpush.bf16.msra.mxu0 0
  %457 = vmatpush.bf16.msra.mxu0 0
  %458 = vmatpush.bf16.msra.mxu0 0
  %459 = vmatpush.bf16.msra.mxu0 0
  %460 = vmatpush.bf16.msra.mxu0 0
  %461 = vmatpush.bf16.msra.mxu0 %v452
  %462 = vmatpush.bf16.msra.mxu0 %v451
  %463 = vmatmul.bf16.gmra.mxu0 %v267
  %v464 = vpop.f32.mrf.mxu0
  %v465 = vadd.f32 %v441, %v464
  %v466 = vpop.f32.mrf.mxu0
  %v467 = vadd.f32 %v441, %v466
  %468 = vmatmul.bf16.gmra.mxu0 %v270
  %v469 = vpop.f32.mrf.mxu0
  %v470 = vadd.f32 %v441, %v469
  %v471 = vpop.f32.mrf.mxu0
  %v472 = vadd.f32 %v441, %v471
  %473 = vmatmul.bf16.gmra.mxu0 %v273
  %v474 = vpop.f32.mrf.mxu0
  %v475 = vadd.f32 %v441, %v474
  %v476 = vpop.f32.mrf.mxu0
  %v477 = vadd.f32 %v441, %v476
  %478 = vmatmul.bf16.gmra.mxu0 %v276
  %v479 = vpop.f32.mrf.mxu0
  %v480 = vadd.f32 %v441, %v479
  %v481 = vpop.f32.mrf.mxu0
  %v482 = vadd.f32 %v441, %v481
  %483 = vdwg.mxu0
  %484 = vst.msk [vmem:[#allocation5] sm:$0xff] %vm200, %v465
  %485 = vst.msk [vmem:[#allocation5 + $0x8] sm:$0xff] %vm200, %v467
  %486 = vst.msk [vmem:[#allocation5 + $0x10] sm:$0xff] %vm200, %v470
  %487 = vst.msk [vmem:[#allocation5 + $0x18] sm:$0xff] %vm200, %v472
  %488 = vst.msk [vmem:[#allocation5 + $0x20] sm:$0xff] %vm200, %v475
  %489 = vst.msk [vmem:[#allocation5 + $0x28] sm:$0xff] %vm200, %v477
  %490 = vst.msk [vmem:[#allocation5 + $0x30] sm:$0xff] %vm200, %v480
  %491 = vst.msk [vmem:[#allocation5 + $0x38] sm:$0xff] %vm200, %v482
  %s492 = scalar_lea.vmem %s8, 64
  %v493 = vld [vmem:[%s492] sm:$0xf]
  %v494 = vld [vmem:[%s492 + $0x4] sm:$0xf]
  %v495 = vld [vmem:[%s492 + $0x8] sm:$0xf]
  %v496 = vld [vmem:[%s492 + $0xc] sm:$0xf]
  %s497 = scalar_lea.vmem %s10, 4
  %v498 = vld [vmem:[%s497] sm:$0x1]
  %v500 = vperm.slane %v498, 0
  %v506 = vunpack.c.l.b16 %v493
  %v507 = vunpack.c.l.b16 %v494
  %v508 = vunpack.c.l.b16 %v495
  %v509 = vunpack.c.l.b16 %v496
  %v510 = vpack.c.b16 %v507, %v506
  %v511 = vpack.c.b16 %v509, %v508
  %514 = vmatpush.bf16.msra.mxu0 0
  %515 = vmatpush.bf16.msra.mxu0 0
  %516 = vmatpush.bf16.msra.mxu0 0
  %517 = vmatpush.bf16.msra.mxu0 0
  %518 = vmatpush.bf16.msra.mxu0 0
  %519 = vmatpush.bf16.msra.mxu0 0
  %520 = vmatpush.bf16.msra.mxu0 %v511
  %521 = vmatpush.bf16.msra.mxu0 %v510
  %522 = vmatmul.bf16.gmra.mxu0 %v267
  %v523 = vpop.f32.mrf.mxu0
  %v524 = vadd.f32 %v500, %v523
  %v525 = vpop.f32.mrf.mxu0
  %v526 = vadd.f32 %v500, %v525
  %527 = vmatmul.bf16.gmra.mxu0 %v270
  %v528 = vpop.f32.mrf.mxu0
  %v529 = vadd.f32 %v500, %v528
  %v530 = vpop.f32.mrf.mxu0
  %v531 = vadd.f32 %v500, %v530
  %532 = vmatmul.bf16.gmra.mxu0 %v273
  %v533 = vpop.f32.mrf.mxu0
  %v534 = vadd.f32 %v500, %v533
  %v535 = vpop.f32.mrf.mxu0
  %v536 = vadd.f32 %v500, %v535
  %537 = vmatmul.bf16.gmra.mxu0 %v276
  %v538 = vpop.f32.mrf.mxu0
  %v539 = vadd.f32 %v500, %v538
  %v540 = vpop.f32.mrf.mxu0
  %v541 = vadd.f32 %v500, %v540
  %542 = vdwg.mxu0
  %543 = vst.msk [vmem:[#allocation6] sm:$0xff] %vm200, %v524
  %544 = vst.msk [vmem:[#allocation6 + $0x8] sm:$0xff] %vm200, %v526
  %545 = vst.msk [vmem:[#allocation6 + $0x10] sm:$0xff] %vm200, %v529
  %546 = vst.msk [vmem:[#allocation6 + $0x18] sm:$0xff] %vm200, %v531
  %547 = vst.msk [vmem:[#allocation6 + $0x20] sm:$0xff] %vm200, %v534
  %548 = vst.msk [vmem:[#allocation6 + $0x28] sm:$0xff] %vm200, %v536
  %549 = vst.msk [vmem:[#allocation6 + $0x30] sm:$0xff] %vm200, %v539
  %550 = vst.msk [vmem:[#allocation6 + $0x38] sm:$0xff] %vm200, %v541
  %s551 = scalar_lea.vmem %s8, 80
  %v552 = vld [vmem:[%s551] sm:$0xf]
  %v553 = vld [vmem:[%s551 + $0x4] sm:$0xf]
  %v554 = vld [vmem:[%s551 + $0x8] sm:$0xf]
  %v555 = vld [vmem:[%s551 + $0xc] sm:$0xf]
  %s556 = scalar_lea.vmem %s10, 5
  %v557 = vld [vmem:[%s556] sm:$0x1]
  %v559 = vperm.slane %v557, 0
  %v565 = vunpack.c.l.b16 %v552
  %v566 = vunpack.c.l.b16 %v553
  %v567 = vunpack.c.l.b16 %v554
  %v568 = vunpack.c.l.b16 %v555
  %v569 = vpack.c.b16 %v566, %v565
  %v570 = vpack.c.b16 %v568, %v567
  %573 = vmatpush.bf16.msra.mxu0 0
  %574 = vmatpush.bf16.msra.mxu0 0
  %575 = vmatpush.bf16.msra.mxu0 0
  %576 = vmatpush.bf16.msra.mxu0 0
  %577 = vmatpush.bf16.msra.mxu0 0
  %578 = vmatpush.bf16.msra.mxu0 0
  %579 = vmatpush.bf16.msra.mxu0 %v570
  %580 = vmatpush.bf16.msra.mxu0 %v569
  %581 = vmatmul.bf16.gmra.mxu0 %v267
  %v582 = vpop.f32.mrf.mxu0
  %v583 = vadd.f32 %v559, %v582
  %v584 = vpop.f32.mrf.mxu0
  %v585 = vadd.f32 %v559, %v584
  %586 = vmatmul.bf16.gmra.mxu0 %v270
  %v587 = vpop.f32.mrf.mxu0
  %v588 = vadd.f32 %v559, %v587
  %v589 = vpop.f32.mrf.mxu0
  %v590 = vadd.f32 %v559, %v589
  %591 = vmatmul.bf16.gmra.mxu0 %v273
  %v592 = vpop.f32.mrf.mxu0
  %v593 = vadd.f32 %v559, %v592
  %v594 = vpop.f32.mrf.mxu0
  %v595 = vadd.f32 %v559, %v594
  %596 = vmatmul.bf16.gmra.mxu0 %v276
  %v597 = vpop.f32.mrf.mxu0
  %v598 = vadd.f32 %v559, %v597
  %v599 = vpop.f32.mrf.mxu0
  %v600 = vadd.f32 %v559, %v599
  %601 = vdwg.mxu0
  %602 = vst.msk [vmem:[#allocation7] sm:$0xff] %vm200, %v583
  %603 = vst.msk [vmem:[#allocation7 + $0x8] sm:$0xff] %vm200, %v585
  %604 = vst.msk [vmem:[#allocation7 + $0x10] sm:$0xff] %vm200, %v588
  %605 = vst.msk [vmem:[#allocation7 + $0x18] sm:$0xff] %vm200, %v590
  %606 = vst.msk [vmem:[#allocation7 + $0x20] sm:$0xff] %vm200, %v593
  %607 = vst.msk [vmem:[#allocation7 + $0x28] sm:$0xff] %vm200, %v595
  %608 = vst.msk [vmem:[#allocation7 + $0x30] sm:$0xff] %vm200, %v598
  %609 = vst.msk [vmem:[#allocation7 + $0x38] sm:$0xff] %vm200, %v600
  %v610 = vld [vmem:[%s9] sm:$0xf]
  %v611 = vld [vmem:[%s9 + $0x4] sm:$0xf]
  %v612 = vld [vmem:[%s9 + $0x8] sm:$0xf]
  %v613 = vld [vmem:[%s9 + $0xc] sm:$0xf]
  %s614 = scalar_lea.vmem %s9, 16
  %v615 = vld [vmem:[%s614] sm:$0xf]
  %v616 = vld [vmem:[%s614 + $0x4] sm:$0xf]
  %v617 = vld [vmem:[%s614 + $0x8] sm:$0xf]
  %v618 = vld [vmem:[%s614 + $0xc] sm:$0xf]
  %s619 = scalar_lea.vmem %s9, 32
  %v620 = vld [vmem:[%s619] sm:$0xf]
  %v621 = vld [vmem:[%s619 + $0x4] sm:$0xf]
  %v622 = vld [vmem:[%s619 + $0x8] sm:$0xf]
  %v623 = vld [vmem:[%s619 + $0xc] sm:$0xf]
  %s624 = scalar_lea.vmem %s9, 48
  %v625 = vld [vmem:[%s624] sm:$0xf]
  %v626 = vld [vmem:[%s624 + $0x4] sm:$0xf]
  %v627 = vld [vmem:[%s624 + $0x8] sm:$0xf]
  %v628 = vld [vmem:[%s624 + $0xc] sm:$0xf]
  %s629 = scalar_lea.vmem %s9, 64
  %v630 = vld [vmem:[%s629] sm:$0xf]
  %v631 = vld [vmem:[%s629 + $0x4] sm:$0xf]
  %v632 = vld [vmem:[%s629 + $0x8] sm:$0xf]
  %v633 = vld [vmem:[%s629 + $0xc] sm:$0xf]
  %s634 = scalar_lea.vmem %s9, 80
  %v635 = vld [vmem:[%s634] sm:$0xf]
  %v636 = vld [vmem:[%s634 + $0x4] sm:$0xf]
  %v637 = vld [vmem:[%s634 + $0x8] sm:$0xf]
  %v638 = vld [vmem:[%s634 + $0xc] sm:$0xf]
  %v639 = vld [vmem:[%s11] sm:$0x1]
  %s640 = scalar_lea.vmem %s11, 1
  %v641 = vld [vmem:[%s640] sm:$0x1]
  %v642 = vld [vmem:[%s1] sm:$0xff]
  %s643 = sld [smem:[#allocation8]]
  %v644 = vld [vmem:[%s12] sm:$0x1]
  %v646 = vperm.slane %v644, 0
  %s648 = scalar_lea.vmem %s12, 1
  %v649 = vld [vmem:[%s648] sm:$0x1]
  %v651 = vperm.slane %v649, 0
  // While loop
  $region86: #{guo_len_est_forward.1} parent=0 // loop_pre_header
    _
  $region87: #{guo_len_est_forward.1} parent=0 // loop_header
    %s654 = sphi 0, %s656
    %p655 = scmp.ge.s32.totalorder %s654, %s643
    %v659 = vphi %v646, %v804
    %v660 = vphi %v651, %v950
  $region88: #{guo_len_est_forward.1} parent=0 // loop_header_branch
    %658 = sbr.rel (%p655) target = $region92
  $region89: #{guo_len_est_forward.1} parent=0 // loop_body
    %s661 = smul.u32 %s654, 8
    %s662 = scalar_lea.vmem [#allocation2], %s661
    %v663 = vld [vmem:[%s662] sm:$0xff]
    %s664 = scalar_lea.vmem [#allocation3], %s661
    %v665 = vld [vmem:[%s664] sm:$0xff]
    %s666 = scalar_lea.vmem [#allocation4], %s661
    %v667 = vld [vmem:[%s666] sm:$0xff]
    %v668 = vpack.c.bf16 %v659, %v659
    %v673 = vunpack.c.l.b16 %v610
    %v674 = vunpack.c.l.b16 %v611
    %v675 = vunpack.c.l.b16 %v612
    %v676 = vunpack.c.l.b16 %v613
    %v677 = vpack.c.b16 %v674, %v673
    %v678 = vpack.c.b16 %v676, %v675
    %v682 = vsel %vm200, %v668, 0
    %684 = vmatpush.bf16.msra.mxu0 0
    %685 = vmatpush.bf16.msra.mxu0 0
    %686 = vmatpush.bf16.msra.mxu0 0
    %687 = vmatpush.bf16.msra.mxu0 0
    %688 = vmatpush.bf16.msra.mxu0 0
    %689 = vmatpush.bf16.msra.mxu0 0
    %690 = vmatpush.bf16.msra.mxu0 %v678
    %691 = vmatpush.bf16.msra.mxu0 %v677
    %692 = vmatmul.bf16.gmra.mxu0 %v682
    %v693 = vpop.f32.mrf.mxu0
    %v694 = vadd.f32 0.0, %v693
    %v695 = vpop.f32.mrf.mxu0
    %696 = vdwg.mxu0
    %v697 = vadd.f32 %v663, %v694
    %v698 = vxor.u32 %v697, 2147483648
    %v699 = vmul.f32 %v698, 1.442695
    %v700 = vpow.pop %v699
    %v701 = vadd.f32 %v700, 1.0
    %v702 = vrcp.pop %v701
    %v703 = vmul.f32 %v701, %v702
    %v704 = vsub.f32 1.0, %v703
    %v705 = vmul.f32 %v702, %v704
    %v706 = vadd.f32 %v702, %v705
    %vm707 = vweird.f32 %v701
    %vm708 = vweird.f32 %v702
    %vm709 = vmor %vm707, %vm708
    %v710 = vsel %vm709, %v702, %v706
    %v711 = vand.u32 2147483647, %v701
    %vm712 = vcmp.eq.f32.partialorder %v711, 8.507059e+37
    %v713 = vand.u32 %v701, 2147483648
    %v714 = vor.u32 1.1754944e-38, %v713
    %v715 = vsel %vm712, %v714, %v710
    %v716 = vmul.f32 1.0, %v715
    %v721 = vunpack.c.l.b16 %v615
    %v722 = vunpack.c.l.b16 %v616
    %v723 = vunpack.c.l.b16 %v617
    %v724 = vunpack.c.l.b16 %v618
    %v725 = vpack.c.b16 %v722, %v721
    %v726 = vpack.c.b16 %v724, %v723
    %729 = vmatpush.bf16.msra.mxu0 0
    %730 = vmatpush.bf16.msra.mxu0 0
    %731 = vmatpush.bf16.msra.mxu0 0
    %732 = vmatpush.bf16.msra.mxu0 0
    %733 = vmatpush.bf16.msra.mxu0 0
    %734 = vmatpush.bf16.msra.mxu0 0
    %735 = vmatpush.bf16.msra.mxu0 %v726
    %736 = vmatpush.bf16.msra.mxu0 %v725
    %737 = vmatmul.bf16.gmra.mxu0 %v682
    %v738 = vpop.f32.mrf.mxu0
    %v739 = vadd.f32 0.0, %v738
    %v740 = vpop.f32.mrf.mxu0
    %741 = vdwg.mxu0
    %v742 = vadd.f32 %v665, %v739
    %v743 = vxor.u32 %v742, 2147483648
    %v744 = vmul.f32 %v743, 1.442695
    %v745 = vpow.pop %v744
    %v746 = vadd.f32 %v745, 1.0
    %v747 = vrcp.pop %v746
    %v748 = vmul.f32 %v746, %v747
    %v749 = vsub.f32 1.0, %v748
    %v750 = vmul.f32 %v747, %v749
    %v751 = vadd.f32 %v747, %v750
    %vm752 = vweird.f32 %v746
    %vm753 = vweird.f32 %v747
    %vm754 = vmor %vm752, %vm753
    %v755 = vsel %vm754, %v747, %v751
    %v756 = vand.u32 2147483647, %v746
    %vm757 = vcmp.eq.f32.partialorder %v756, 8.507059e+37
    %v758 = vand.u32 %v746, 2147483648
    %v759 = vor.u32 1.1754944e-38, %v758
    %v760 = vsel %vm757, %v759, %v755
    %v761 = vmul.f32 1.0, %v760
    %v763 = vperm.slane %v639, 0
    %v769 = vunpack.c.l.b16 %v620
    %v770 = vunpack.c.l.b16 %v621
    %v771 = vunpack.c.l.b16 %v622
    %v772 = vunpack.c.l.b16 %v623
    %v773 = vpack.c.b16 %v770, %v769
    %v774 = vpack.c.b16 %v772, %v771
    %777 = vmatpush.bf16.msra.mxu0 0
    %778 = vmatpush.bf16.msra.mxu0 0
    %779 = vmatpush.bf16.msra.mxu0 0
    %780 = vmatpush.bf16.msra.mxu0 0
    %781 = vmatpush.bf16.msra.mxu0 0
    %782 = vmatpush.bf16.msra.mxu0 0
    %783 = vmatpush.bf16.msra.mxu0 %v774
    %784 = vmatpush.bf16.msra.mxu0 %v773
    %785 = vmatmul.bf16.gmra.mxu0 %v682
    %v786 = vpop.f32.mrf.mxu0
    %v787 = vadd.f32 %v763, %v786
    %v788 = vpop.f32.mrf.mxu0
    %789 = vdwg.mxu0
    %v790 = vmul.f32 %v716, %v787
    %v791 = vadd.f32 %v667, %v790
    %v792 = vtanh.pop %v791
    %v793 = vsub.f32 1.0, %v761
    %v794 = vmul.f32 %v793, %v792
    %v795 = vmul.f32 %v761, %v659
    %v796 = vadd.f32 %v794, %v795
    %v797 = vstv %s654
    %vm798 = vcmp.lt.s32.totalorder %v797, %v642
    %v799 = vsel %vm798, 1, 0
    %800 = vset.pattern.permute.xlu0 0
    %801 = vperm.xlu0 %800, %v799
    %v802 = vpop.permute.xlu0 %801
    %vm803 = vcmp.eq.s32.totalorder %v802, 1
    %v804 = vsel %vm803, %v796, %v659
    %s805 = ssub.s32 %s643, 1
    %s806 = ssub.s32 %s805, %s654
    %s807 = smul.u32 %s806, 8
    %s808 = scalar_lea.vmem [#allocation5], %s807
    %v809 = vld [vmem:[%s808] sm:$0xff]
    %s810 = scalar_lea.vmem [#allocation6], %s807
    %v811 = vld [vmem:[%s810] sm:$0xff]
    %s812 = scalar_lea.vmem [#allocation7], %s807
    %v813 = vld [vmem:[%s812] sm:$0xff]
    %v814 = vpack.c.bf16 %v660, %v660
    %v819 = vunpack.c.l.b16 %v625
    %v820 = vunpack.c.l.b16 %v626
    %v821 = vunpack.c.l.b16 %v627
    %v822 = vunpack.c.l.b16 %v628
    %v823 = vpack.c.b16 %v820, %v819
    %v824 = vpack.c.b16 %v822, %v821
    %v828 = vsel %vm200, %v814, 0
    %830 = vmatpush.bf16.msra.mxu0 0
    %831 = vmatpush.bf16.msra.mxu0 0
    %832 = vmatpush.bf16.msra.mxu0 0
    %833 = vmatpush.bf16.msra.mxu0 0
    %834 = vmatpush.bf16.msra.mxu0 0
    %835 = vmatpush.bf16.msra.mxu0 0
    %836 = vmatpush.bf16.msra.mxu0 %v824
    %837 = vmatpush.bf16.msra.mxu0 %v823
    %838 = vmatmul.bf16.gmra.mxu0 %v828
    %v839 = vpop.f32.mrf.mxu0
    %v840 = vadd.f32 0.0, %v839
    %v841 = vpop.f32.mrf.mxu0
    %842 = vdwg.mxu0
    %v843 = vadd.f32 %v809, %v840
    %v844 = vxor.u32 %v843, 2147483648
    %v845 = vmul.f32 %v844, 1.442695
    %v846 = vpow.pop %v845
    %v847 = vadd.f32 %v846, 1.0
    %v848 = vrcp.pop %v847
    %v849 = vmul.f32 %v847, %v848
    %v850 = vsub.f32 1.0, %v849
    %v851 = vmul.f32 %v848, %v850
    %v852 = vadd.f32 %v848, %v851
    %vm853 = vweird.f32 %v847
    %vm854 = vweird.f32 %v848
    %vm855 = vmor %vm853, %vm854
    %v856 = vsel %vm855, %v848, %v852
    %v857 = vand.u32 2147483647, %v847
    %vm858 = vcmp.eq.f32.partialorder %v857, 8.507059e+37
    %v859 = vand.u32 %v847, 2147483648
    %v860 = vor.u32 1.1754944e-38, %v859
    %v861 = vsel %vm858, %v860, %v856
    %v862 = vmul.f32 1.0, %v861
    %v867 = vunpack.c.l.b16 %v630
    %v868 = vunpack.c.l.b16 %v631
    %v869 = vunpack.c.l.b16 %v632
    %v870 = vunpack.c.l.b16 %v633
    %v871 = vpack.c.b16 %v868, %v867
    %v872 = vpack.c.b16 %v870, %v869
    %875 = vmatpush.bf16.msra.mxu0 0
    %876 = vmatpush.bf16.msra.mxu0 0
    %877 = vmatpush.bf16.msra.mxu0 0
    %878 = vmatpush.bf16.msra.mxu0 0
    %879 = vmatpush.bf16.msra.mxu0 0
    %880 = vmatpush.bf16.msra.mxu0 0
    %881 = vmatpush.bf16.msra.mxu0 %v872
    %882 = vmatpush.bf16.msra.mxu0 %v871
    %883 = vmatmul.bf16.gmra.mxu0 %v828
    %v884 = vpop.f32.mrf.mxu0
    %v885 = vadd.f32 0.0, %v884
    %v886 = vpop.f32.mrf.mxu0
    %887 = vdwg.mxu0
    %v888 = vadd.f32 %v811, %v885
    %v889 = vxor.u32 %v888, 2147483648
    %v890 = vmul.f32 %v889, 1.442695
    %v891 = vpow.pop %v890
    %v892 = vadd.f32 %v891, 1.0
    %v893 = vrcp.pop %v892
    %v894 = vmul.f32 %v892, %v893
    %v895 = vsub.f32 1.0, %v894
    %v896 = vmul.f32 %v893, %v895
    %v897 = vadd.f32 %v893, %v896
    %vm898 = vweird.f32 %v892
    %vm899 = vweird.f32 %v893
    %vm900 = vmor %vm898, %vm899
    %v901 = vsel %vm900, %v893, %v897
    %v902 = vand.u32 2147483647, %v892
    %vm903 = vcmp.eq.f32.partialorder %v902, 8.507059e+37
    %v904 = vand.u32 %v892, 2147483648
    %v905 = vor.u32 1.1754944e-38, %v904
    %v906 = vsel %vm903, %v905, %v901
    %v907 = vmul.f32 1.0, %v906
    %v909 = vperm.slane %v641, 0
    %v915 = vunpack.c.l.b16 %v635
    %v916 = vunpack.c.l.b16 %v636
    %v917 = vunpack.c.l.b16 %v637
    %v918 = vunpack.c.l.b16 %v638
    %v919 = vpack.c.b16 %v916, %v915
    %v920 = vpack.c.b16 %v918, %v917
    %923 = vmatpush.bf16.msra.mxu0 0
    %924 = vmatpush.bf16.msra.mxu0 0
    %925 = vmatpush.bf16.msra.mxu0 0
    %926 = vmatpush.bf16.msra.mxu0 0
    %927 = vmatpush.bf16.msra.mxu0 0
    %928 = vmatpush.bf16.msra.mxu0 0
    %929 = vmatpush.bf16.msra.mxu0 %v920
    %930 = vmatpush.bf16.msra.mxu0 %v919
    %931 = vmatmul.bf16.gmra.mxu0 %v828
    %v932 = vpop.f32.mrf.mxu0
    %v933 = vadd.f32 %v909, %v932
    %v934 = vpop.f32.mrf.mxu0
    %935 = vdwg.mxu0
    %v936 = vmul.f32 %v862, %v933
    %v937 = vadd.f32 %v813, %v936
    %v938 = vtanh.pop %v937
    %v939 = vsub.f32 1.0, %v907
    %v940 = vmul.f32 %v939, %v938
    %v941 = vmul.f32 %v907, %v660
    %v942 = vadd.f32 %v940, %v941
    %v943 = vstv %s806
    %vm944 = vcmp.lt.s32.totalorder %v943, %v642
    %v945 = vsel %vm944, 1, 0
    %946 = vset.pattern.permute.xlu0 0
    %947 = vperm.xlu0 %946, %v945
    %v948 = vpop.permute.xlu0 %947
    %vm949 = vcmp.eq.s32.totalorder %v948, 1
    %v950 = vsel %vm949, %v942, %v660
  $region90: #{guo_len_est_forward.1} parent=0 // loop_footer
    %s656 = sadd.s32 %s654, 1
  $region91: #{guo_len_est_forward.1} parent=0 // loop_footer_branch
    %653 = sbr.rel target = $region87
  $region92: #{guo_len_est_forward.1} parent=0 // loop_exit
    _
  %v951 = vpack.c.bf16 %v659, %v659
  %v952 = vld [vmem:[%s13] sm:$0xf]
  %v953 = vld [vmem:[%s13 + $0x4] sm:$0xf]
  %v954 = vld [vmem:[%s13 + $0x8] sm:$0xf]
  %v955 = vld [vmem:[%s13 + $0xc] sm:$0xf]
  %v956 = vpack.c.bf16 %v660, %v660
  %v957 = vld [vmem:[%s13 + $0x10] sm:$0xf]
  %v958 = vld [vmem:[%s13 + $0x14] sm:$0xf]
  %v959 = vld [vmem:[%s13 + $0x18] sm:$0xf]
  %v960 = vld [vmem:[%s13 + $0x1c] sm:$0xf]
  %v965 = vunpack.c.l.b16 %v957
  %v966 = vunpack.c.l.b16 %v958
  %v967 = vunpack.c.l.b16 %v959
  %v968 = vunpack.c.l.b16 %v960
  %v969 = vpack.c.b16 %v966, %v965
  %v970 = vpack.c.b16 %v968, %v967
  %v974 = vsel %vm200, %v956, 0
  %976 = vmatpush.bf16.msra.mxu0 0
  %977 = vmatpush.bf16.msra.mxu0 0
  %978 = vmatpush.bf16.msra.mxu0 0
  %979 = vmatpush.bf16.msra.mxu0 0
  %980 = vmatpush.bf16.msra.mxu0 0
  %981 = vmatpush.bf16.msra.mxu0 0
  %982 = vmatpush.bf16.msra.mxu0 %v970
  %983 = vmatpush.bf16.msra.mxu0 %v969
  %984 = vmatmul.bf16.gmra.mxu0 %v974
  %v985 = vpop.f32.mrf.mxu0
  %v986 = vadd.f32 0.0, %v985
  %v987 = vpop.f32.mrf.mxu0
  %988 = vdwg.mxu0
  %v993 = vunpack.c.l.b16 %v952
  %v994 = vunpack.c.l.b16 %v953
  %v995 = vunpack.c.l.b16 %v954
  %v996 = vunpack.c.l.b16 %v955
  %v997 = vpack.c.b16 %v994, %v993
  %v998 = vpack.c.b16 %v996, %v995
  %v1002 = vsel %vm200, %v951, 0
  %1004 = vmatpush.bf16.msra.mxu0 0
  %1005 = vmatpush.bf16.msra.mxu0 0
  %1006 = vmatpush.bf16.msra.mxu0 0
  %1007 = vmatpush.bf16.msra.mxu0 0
  %1008 = vmatpush.bf16.msra.mxu0 0
  %1009 = vmatpush.bf16.msra.mxu0 0
  %1010 = vmatpush.bf16.msra.mxu0 %v998
  %1011 = vmatpush.bf16.msra.mxu0 %v997
  %1012 = vmatmul.bf16.gmra.mxu0 %v1002
  %v1013 = vpop.f32.mrf.mxu0
  %v1014 = vadd.f32 %v986, %v1013
  %v1015 = vpop.f32.mrf.mxu0
  %1016 = vdwg.mxu0
  %v1017 = vld [vmem:[%s14] sm:$0x1]
  %v1018 = vperm.slane %v1017, 0
  %v1019 = vadd.f32 %v1014, %v1018
  %v1020 = vld [vmem:[%s14 + $0x1] sm:$0x1]
  %v1021 = vld [vmem:[%s14 + $0x2] sm:$0x1]
  %vm1022 = vcmask 523264
  %v1023 = vsel %vm1022, %v1019, 0.0
  %1024 = vadd.xlane.f32.xlu0 %v1023
  %v1025 = vpop.xlane.xlu0 %1024
  %v1026 = vrcp.pop 64.0
  %v1027 = vmul.f32 64.0, %v1026
  %v1028 = vsub.f32 1.0, %v1027
  %v1029 = vmul.f32 %v1026, %v1028
  %v1030 = vadd.f32 %v1026, %v1029
  %vm1031 = vweird.f32 %v1026
  %v1032 = vsel %vm1031, %v1026, %v1030
  %v1033 = vmul.f32 %v1025, %v1032
  %v1034 = vsub.f32 %v1019, %v1033
  %v1035 = vmul.f32 %v1034, %v1034
  %v1036 = vsel %vm1022, %v1035, 0.0
  %1037 = vadd.xlane.f32.xlu0 %v1036
  %v1038 = vpop.xlane.xlu0 %1037
  %v1039 = vmul.f32 %v1038, %v1032
  %v1040 = vadd.f32 %v1039, 1e-05
  %v1041 = vrsqrt.pop %v1040
  %v1042 = vmul.f32 %v1041, %v1040
  %v1043 = vmul.f32 %v1042, %v1041
  %v1044 = vmul.f32 0.5, %v1043
  %v1045 = vsub.f32 1.5, %v1044
  %v1046 = vmul.f32 %v1041, %v1045
  %vm1047 = vweird.f32 %v1040
  %vm1048 = vweird.f32 %v1041
  %vm1049 = vmor %vm1047, %vm1048
  %v1050 = vsel %vm1049, %v1041, %v1046
  %v1051 = vmul.f32 %v1034, %v1050
  %v1052 = vperm.slane %v1020, 0
  %v1053 = vmul.f32 %v1051, %v1052
  %v1054 = vperm.slane %v1021, 0
  %v1055 = vadd.f32 %v1053, %v1054
  %vm1056 = vcmp.ge.f32.partialorder %v1055, 0.0
  %v1057 = vmul.f32 %v1055, 0.2
  %v1058 = vsel %vm1056, %v1055, %v1057
  %v1059 = vpack.c.bf16 %v1058, %v1058
  %v1060 = vld [vmem:[%s15] sm:$0xf]
  %v1061 = vld [vmem:[%s15 + $0x4] sm:$0xf]
  %v1062 = vld [vmem:[%s15 + $0x8] sm:$0xf]
  %v1063 = vld [vmem:[%s15 + $0xc] sm:$0xf]
  %v1064 = vld [vmem:[%s15 + $0x10] sm:$0xf]
  %v1065 = vld [vmem:[%s15 + $0x14] sm:$0xf]
  %v1066 = vld [vmem:[%s15 + $0x18] sm:$0xf]
  %v1067 = vld [vmem:[%s15 + $0x1c] sm:$0xf]
  %v1068 = vld [vmem:[%s16] sm:$0x1]
  %v1069 = vperm.slane %v1068, 0
  %v1078 = vunpack.c.l.b16 %v1060
  %v1079 = vunpack.c.l.b16 %v1061
  %v1080 = vunpack.c.l.b16 %v1062
  %v1081 = vunpack.c.l.b16 %v1063
  %v1082 = vunpack.c.l.b16 %v1064
  %v1083 = vunpack.c.l.b16 %v1065
  %v1084 = vunpack.c.l.b16 %v1066
  %v1085 = vunpack.c.l.b16 %v1067
  %v1086 = vpack.c.b16 %v1079, %v1078
  %v1087 = vpack.c.b16 %v1081, %v1080
  %v1088 = vpack.c.b16 %v1083, %v1082
  %v1089 = vpack.c.b16 %v1085, %v1084
  %v1095 = vsel %vm1022, %v1059, 0
  %1097 = vmatpush.bf16.msra.mxu0 0
  %1098 = vmatpush.bf16.msra.mxu0 0
  %1099 = vmatpush.bf16.msra.mxu0 0
  %1100 = vmatpush.bf16.msra.mxu0 0
  %1101 = vmatpush.bf16.msra.mxu0 %v1089
  %1102 = vmatpush.bf16.msra.mxu0 %v1088
  %1103 = vmatpush.bf16.msra.mxu0 %v1087
  %1104 = vmatpush.bf16.msra.mxu0 %v1086
  %1105 = vmatmul.bf16.gmra.mxu0 %v1095
  %v1106 = vpop.f32.mrf.mxu0
  %v1107 = vadd.f32 %v1069, %v1106
  %v1108 = vpop.f32.mrf.mxu0
  %1109 = vdwg.mxu0
  %v1110 = vld [vmem:[%s16 + $0x1] sm:$0x1]
  %v1111 = vld [vmem:[%s16 + $0x2] sm:$0x1]
  %v1112 = vsel %vm200, %v1107, 0.0
  %1113 = vadd.xlane.f32.xlu0 %v1112
  %v1114 = vpop.xlane.xlu0 %1113
  %v1115 = vrcp.pop 32.0
  %v1116 = vmul.f32 32.0, %v1115
  %v1117 = vsub.f32 1.0, %v1116
  %v1118 = vmul.f32 %v1115, %v1117
  %v1119 = vadd.f32 %v1115, %v1118
  %vm1120 = vweird.f32 %v1115
  %v1121 = vsel %vm1120, %v1115, %v1119
  %v1122 = vmul.f32 %v1114, %v1121
  %v1123 = vsub.f32 %v1107, %v1122
  %v1124 = vmul.f32 %v1123, %v1123
  %v1125 = vsel %vm200, %v1124, 0.0
  %1126 = vadd.xlane.f32.xlu0 %v1125
  %v1127 = vpop.xlane.xlu0 %1126
  %v1128 = vmul.f32 %v1127, %v1121
  %v1129 = vadd.f32 %v1128, 1e-05
  %v1130 = vrsqrt.pop %v1129
  %v1131 = vmul.f32 %v1130, %v1129
  %v1132 = vmul.f32 %v1131, %v1130
  %v1133 = vmul.f32 0.5, %v1132
  %v1134 = vsub.f32 1.5, %v1133
  %v1135 = vmul.f32 %v1130, %v1134
  %vm1136 = vweird.f32 %v1129
  %vm1137 = vweird.f32 %v1130
  %vm1138 = vmor %vm1136, %vm1137
  %v1139 = vsel %vm1138, %v1130, %v1135
  %v1140 = vmul.f32 %v1123, %v1139
  %v1141 = vperm.slane %v1110, 0
  %v1142 = vmul.f32 %v1140, %v1141
  %v1143 = vperm.slane %v1111, 0
  %v1144 = vadd.f32 %v1142, %v1143
  %vm1145 = vcmp.ge.f32.partialorder %v1144, 0.0
  %v1146 = vmul.f32 %v1144, 0.2
  %v1147 = vsel %vm1145, %v1144, %v1146
  %v1148 = vpack.c.bf16 %v1147, %v1147
  %v1149 = vld [vmem:[%s17] sm:$0xf]
  %v1150 = vld [vmem:[%s17 + $0x4] sm:$0xf]
  %v1151 = vld [vmem:[%s17 + $0x8] sm:$0xf]
  %v1152 = vld [vmem:[%s17 + $0xc] sm:$0xf]
  %v1153 = vld [vmem:[%s18] sm:$0x1]
  %v1154 = vperm.slane %v1153, 0
  %v1159 = vunpack.c.l.b16 %v1149
  %v1160 = vunpack.c.l.b16 %v1150
  %v1161 = vunpack.c.l.b16 %v1151
  %v1162 = vunpack.c.l.b16 %v1152
  %v1163 = vpack.c.b16 %v1160, %v1159
  %v1164 = vpack.c.b16 %v1162, %v1161
  %v1168 = vsel %vm200, %v1148, 0
  %1170 = vmatpush.bf16.msra.mxu0 0
  %1171 = vmatpush.bf16.msra.mxu0 0
  %1172 = vmatpush.bf16.msra.mxu0 0
  %1173 = vmatpush.bf16.msra.mxu0 0
  %1174 = vmatpush.bf16.msra.mxu0 0
  %1175 = vmatpush.bf16.msra.mxu0 0
  %1176 = vmatpush.bf16.msra.mxu0 %v1164
  %1177 = vmatpush.bf16.msra.mxu0 %v1163
  %1178 = vmatmul.bf16.gmra.mxu0 %v1168
  %v1179 = vpop.f32.mrf.mxu0
  %v1180 = vadd.f32 %v1154, %v1179
  %v1181 = vpop.f32.mrf.mxu0
  %1182 = vdwg.mxu0
  %v1183 = vld [vmem:[%s18 + $0x1] sm:$0x1]
  %v1184 = vld [vmem:[%s18 + $0x2] sm:$0x1]
  %v1185 = vsel %vm110, %v1180, 0.0
  %1186 = vadd.xlane.f32.xlu0 %v1185
  %v1187 = vpop.xlane.xlu0 %1186
  %v1188 = vrcp.pop 16.0
  %v1189 = vmul.f32 16.0, %v1188
  %v1190 = vsub.f32 1.0, %v1189
  %v1191 = vmul.f32 %v1188, %v1190
  %v1192 = vadd.f32 %v1188, %v1191
  %vm1193 = vweird.f32 %v1188
  %v1194 = vsel %vm1193, %v1188, %v1192
  %v1195 = vmul.f32 %v1187, %v1194
  %v1196 = vsub.f32 %v1180, %v1195
  %v1197 = vmul.f32 %v1196, %v1196
  %v1198 = vsel %vm110, %v1197, 0.0
  %1199 = vadd.xlane.f32.xlu0 %v1198
  %v1200 = vpop.xlane.xlu0 %1199
  %v1201 = vmul.f32 %v1200, %v1194
  %v1202 = vadd.f32 %v1201, 1e-05
  %v1203 = vrsqrt.pop %v1202
  %v1204 = vmul.f32 %v1203, %v1202
  %v1205 = vmul.f32 %v1204, %v1203
  %v1206 = vmul.f32 0.5, %v1205
  %v1207 = vsub.f32 1.5, %v1206
  %v1208 = vmul.f32 %v1203, %v1207
  %vm1209 = vweird.f32 %v1202
  %vm1210 = vweird.f32 %v1203
  %vm1211 = vmor %vm1209, %vm1210
  %v1212 = vsel %vm1211, %v1203, %v1208
  %v1213 = vmul.f32 %v1196, %v1212
  %v1214 = vperm.slane %v1183, 0
  %v1215 = vmul.f32 %v1213, %v1214
  %v1216 = vperm.slane %v1184, 0
  %v1217 = vadd.f32 %v1215, %v1216
  %vm1218 = vcmp.ge.f32.partialorder %v1217, 0.0
  %v1219 = vmul.f32 %v1217, 0.2
  %v1220 = vsel %vm1218, %v1217, %v1219
  %v1221 = vpack.c.bf16 %v1220, %v1220
  %v1222 = vld [vmem:[%s19] sm:$0xf]
  %v1223 = vld [vmem:[%s19 + $0x4] sm:$0xf]
  %v1224 = vld [vmem:[%s20] sm:$0x1]
  %v1226 = vperm.slane %v1224, 0
  %v1230 = vunpack.c.l.b16 %v1222
  %v1231 = vunpack.c.l.b16 %v1223
  %v1232 = vpack.c.b16 %v1231, %v1230
  %v1235 = vsel %vm110, %v1221, 0
  %1237 = vmatpush.bf16.msra.mxu0 0
  %1238 = vmatpush.bf16.msra.mxu0 0
  %1239 = vmatpush.bf16.msra.mxu0 0
  %1240 = vmatpush.bf16.msra.mxu0 0
  %1241 = vmatpush.bf16.msra.mxu0 0
  %1242 = vmatpush.bf16.msra.mxu0 0
  %1243 = vmatpush.bf16.msra.mxu0 0
  %1244 = vmatpush.bf16.msra.mxu0 %v1232
  %1245 = vmatmul.bf16.gmra.mxu0 %v1235
  %v1246 = vpop.f32.mrf.mxu0
  %v1247 = vadd.f32 %v1226, %v1246
  %v1248 = vpop.f32.mrf.mxu0
  %1249 = vdwg.mxu0
  %1250 = vst [vmem:[%s21] sm:$0xff] %v1247
  // Predicated region
  $region93: #{guo_len_est_forward.1} parent=0 // pred_check
    _
  $region94: #{guo_len_est_forward.1} parent=0 // pred_check_branch
    %1252 = sbr.rel (0) target = $region96
  $region95: #{guo_len_est_forward.1} parent=0 // pred_region
    _
  $region96: #{guo_len_est_forward.1} parent=0 // pred_fallthru
    _
  // Predicated region
  $region97: #{guo_len_est_forward.1} parent=0 // pred_check
    _
  $region98: #{guo_len_est_forward.1} parent=0 // pred_check_branch
    %1254 = sbr.rel (0) target = $region100
  $region99: #{guo_len_est_forward.1} parent=0 // pred_region
    _
  $region100: #{guo_len_est_forward.1} parent=0 // pred_fallthru
    _

</llo_original>
